<compile_context>
chip_gen: v5e
topology: v5e:2x2
jax: 0.10.0
libtpu: 0.0.40
codegen_flags: <defaults>
</compile_context>

<pallas_src>
import functools

import numpy as np
import jax
import jax.numpy as jnp
from jax.experimental import pallas as pl
from jax.experimental.pallas import tpu as pltpu

# TODO(synk): cv2.SIFT_create().detectAndCompute (keypoint detection) has no
# Pallas equivalent; descriptors/keypoints are synthesized deterministically.

# TODO(synk): on v6e/v7x descriptors could be cast to bf16 (f32 accumulation)
# for extra MXU throughput; kept f32 so the kernel matches the f32 reference.

_EPS = 1e-12


def _round_up(x, m):
    return ((x + m - 1) // m) * m


def _pad_rows(x, n_pad):
    n = x.shape[0]
    if n == n_pad:
        return x
    pad = jnp.zeros((n_pad - n,) + x.shape[1:], x.dtype)
    return jnp.concatenate([x, pad], axis=0)


# --------------------------------------------------------------------------
# Kernel 1: hoisted L2 normalization (rsqrt + eps), tiled over keypoints.
# --------------------------------------------------------------------------
def _l2norm_kernel(x_ref, o_ref):
    x = x_ref[...]
    inv = jax.lax.rsqrt(jnp.sum(x * x, axis=1, keepdims=True) + _EPS)
    o_ref[...] = x * inv


def l2_normalize(x, tile):
    n, d = x.shape
    return pl.pallas_call(
        _l2norm_kernel,
        out_shape=jax.ShapeDtypeStruct((n, d), x.dtype),
        grid=(n // tile,),
        in_specs=[pl.BlockSpec((tile, d), lambda i: (i, 0))],
        out_specs=pl.BlockSpec((tile, d), lambda i: (i, 0)),
        compiler_params=pltpu.CompilerParams(
            dimension_semantics=("parallel",)),
    )(x)


# --------------------------------------------------------------------------
# Kernel 2: tiled similarity + online mutual-NN reductions.
# --------------------------------------------------------------------------
def _mnn_tiled_kernel(d1_ref, d2_ref,
                      nn12_ref, sc12_ref, colmax_ref, colarg_ref,
                      *, tm, tn, n1, n2, need_mask):
    i = pl.program_id(0)   # query (N1) tile     -> "parallel"
    j = pl.program_id(1)   # database (N2) tile  -> "arbitrary" (reduction)

    # Init the resident row accumulators at the start of each N2 sweep.
    @pl.when(j == 0)
    def _():
        sc12_ref[...] = jnp.full_like(sc12_ref, -jnp.inf)
        nn12_ref[...] = jnp.zeros_like(nn12_ref)

    d1 = d1_ref[...]                      # [tm, D] (already L2-normalized)
    d2 = d2_ref[...]                      # [tn, D]

    # MXU matmul contracting the descriptor dim of BOTH operands
    # (no explicit transpose of d2).
    m = jax.lax.dot_general(
        d1, d2,
        dimension_numbers=(((1,), (1,)), ((), ())),
        preferred_element_type=jnp.float32)          # [tm, tn]

    if need_mask:
        row_ids = i * tm + jax.lax.broadcasted_iota(jnp.int32, (tm, 1), 0)
        col_ids = j * tn + jax.lax.broadcasted_iota(jnp.int32, (1, tn), 1)
        valid = (row_ids < n1) & (col_ids < n2)
        m = jnp.where(valid, m, -jnp.inf)

    # ---- row direction (nn12 / scores): online max/argmax over N2 tiles ----
    tile_rmax = jnp.max(m, axis=1, keepdims=True)                       # [tm,1]
    tile_rarg = (j * tn + jnp.argmax(m, axis=1)).astype(jnp.int32)[:, None]
    better = tile_rmax > sc12_ref[...]   # strict > keeps first occurrence
    sc12_ref[...] = jnp.where(better, tile_rmax, sc12_ref[...])
    nn12_ref[...] = jnp.where(better, tile_rarg, nn12_ref[...])

    # ---- column direction (nn21): per-row-tile partials, combined in JAX ----
    cmax = jnp.max(m, axis=0)                                           # [tn]
    carg = (i * tm + jnp.argmax(m, axis=0)).astype(jnp.int32)           # [tn]
    colmax_ref[...] = cmax[None, None, :]
    colarg_ref[...] = carg[None, None, :]


def mnn_matching_core(desc1, desc2, tm=256, tn=256):
    """Runs the Pallas kernels. desc1: [N1, D], desc2: [N2, D] (float32).

    Returns nn12 [N1] i32, nn21 [N2] i32, scores [N1] f32, matching the
    PyTorch mnn_matching intermediate values.
    """
    n1, d = desc1.shape
    n2, d2 = desc2.shape
    assert d == d2 and d % 128 == 0

    n1p = _round_up(n1, tm)
    n2p = _round_up(n2, tn)
    d1 = _pad_rows(jnp.asarray(desc1, jnp.float32), n1p)
    d2 = _pad_rows(jnp.asarray(desc2, jnp.float32), n2p)

    # Hoisted normalization: once per descriptor set, not per tile-pair.
    d1n = l2_normalize(d1, tm)
    d2n = l2_normalize(d2, tn)

    n1_tiles = n1p // tm
    n2_tiles = n2p // tn
    need_mask = (n1p != n1) or (n2p != n2)

    kernel = functools.partial(
        _mnn_tiled_kernel, tm=tm, tn=tn, n1=n1, n2=n2, need_mask=need_mask)

    flops = 2 * n1p * n2p * d
    bytes_accessed = (n1p * d + n2p * d) * 4 + n1p * 8 + 2 * n1_tiles * n2p * 4

    nn12_out, sc12_out, colmax_part, colarg_part = pl.pallas_call(
        kernel,
        out_shape=(
            jax.ShapeDtypeStruct((n1p, 1), jnp.int32),
            jax.ShapeDtypeStruct((n1p, 1), jnp.float32),
            jax.ShapeDtypeStruct((n1_tiles, 1, n2p), jnp.float32),
            jax.ShapeDtypeStruct((n1_tiles, 1, n2p), jnp.int32),
        ),
        grid=(n1_tiles, n2_tiles),
        in_specs=[
            pl.BlockSpec((tm, d), lambda i, j: (i, 0)),
            pl.BlockSpec((tn, d), lambda i, j: (j, 0)),
        ],
        out_specs=(
            pl.BlockSpec((tm, 1), lambda i, j: (i, 0)),
            pl.BlockSpec((tm, 1), lambda i, j: (i, 0)),
            pl.BlockSpec((1, 1, tn), lambda i, j: (i, 0, j)),
            pl.BlockSpec((1, 1, tn), lambda i, j: (i, 0, j)),
        ),
        compiler_params=pltpu.CompilerParams(
            dimension_semantics=("parallel", "arbitrary"),
            vmem_limit_bytes=32 * 1024 * 1024,
        ),
        cost_estimate=pl.CostEstimate(
            flops=flops, transcendentals=0, bytes_accessed=bytes_accessed),
    )(d1n, d2n)

    nn12 = nn12_out[:n1, 0]
    scores = sc12_out[:n1, 0]

    # Cheap cross-tile combine for the column-direction argmax (nn21).
    colmax = colmax_part[:, 0, :]                    # [n1_tiles, n2p]
    colarg = colarg_part[:, 0, :]                    # [n1_tiles, n2p]
    best_tile = jnp.argmax(colmax, axis=0)           # first occurrence on ties
    nn21 = jnp.take_along_axis(colarg, best_tile[None, :], axis=0)[0, :n2]

    return nn12, nn21, scores


@functools.partial(jax.jit, static_argnames=("threshold",))
def _sift_device(kp1, desc1, kp2, desc2, threshold=0.0):
    """Device-side portion of SIFT.forward (single jitted dispatch)."""
    nn12, nn21, scores = mnn_matching_core(desc1, desc2)

    n1 = desc1.shape[0]
    ids1 = jnp.arange(n1, dtype=jnp.int32)
    mutual = ids1 == nn21[nn12]                      # mutual nearest neighbor
    valid = mutual & (scores > threshold)            # threshold=0 as in module

    # Fixed-shape gather of candidate matches (filtered on host afterwards).
    p1 = kp1[ids1]                                   # [N1, 2]
    p2 = kp2[nn12]                                   # [N1, 2]
    matches_all = jnp.concatenate([p1, p2], axis=1)  # [N1, 4]
    return matches_all, valid


def sift_forward(kp1, des1, kp2, des2, threshold=0.0):
    """JAX/Pallas equivalent of SIFT.forward once keypoints+descriptors exist.

    kp1: [N1, 2] f32, des1: [N1, 128] f32 (same for kp2/des2).
    Returns matches: [M, 4] f32 = hstack(p1, p2) for mutually-nearest pairs
    with score > threshold (dynamic M, resolved with numpy outside the kernel).
    """
    matches_all, valid = _sift_device(
        jnp.asarray(kp1, jnp.float32), jnp.asarray(des1, jnp.float32),
        jnp.asarray(kp2, jnp.float32), jnp.asarray(des2, jnp.float32),
        threshold=float(threshold))
    matches_all = jax.block_until_ready(matches_all)
    valid_np = np.asarray(valid)
    return np.asarray(matches_all)[valid_np]


if __name__ == "__main__":
    # Small deterministic synthetic "SIFT output": 512 / 384 keypoints,
    # 128-d descriptors (standard SIFT descriptor dimension).
    key = jax.random.PRNGKey(0)
    k1, k2, k3, k4 = jax.random.split(key, 4)

    N1, N2, D = 512, 384, 128    # N2 not a tile multiple -> exercises padding/masking
    des1 = jax.random.uniform(k1, (N1, D), jnp.float32, 0.0, 255.0)
    des2 = jax.random.uniform(k2, (N2, D), jnp.float32, 0.0, 255.0)
    kp1 = jax.random.uniform(k3, (N1, 2), jnp.float32, 0.0, 256.0)
    kp2 = jax.random.uniform(k4, (N2, 2), jnp.float32, 0.0, 256.0)

    matches = sift_forward(kp1, des1, kp2, des2, threshold=0.0)

    # Pure-JAX reference of the matching math (same normalization recipe).
    d1n_ref = des1 * jax.lax.rsqrt(jnp.sum(des1 * des1, axis=1, keepdims=True) + _EPS)
    d2n_ref = des2 * jax.lax.rsqrt(jnp.sum(des2 * des2, axis=1, keepdims=True) + _EPS)
    m_ref = jnp.dot(d1n_ref, d2n_ref.T, preferred_element_type=jnp.float32)
    scores_ref = jnp.max(m_ref, axis=1)
    colscores_ref = jnp.max(m_ref, axis=0)

    nn12, nn21, scores = mnn_matching_core(des1, des2)
    nn12_np, nn21_np, scores_np = map(np.asarray, (nn12, nn21, scores))
    m_np = np.asarray(m_ref)
    scores_ref_np = np.asarray(scores_ref)
    colscores_ref_np = np.asarray(colscores_ref)

    # Row-wise max similarities match.
    np.testing.assert_allclose(scores_np, scores_ref_np, rtol=1e-4, atol=1e-4)
    # Chosen row / column matches achieve (near-)optimal similarity
    # (robust to tie-flips from tiny numerical differences).
    chosen_row = m_np[np.arange(N1), nn12_np]
    assert np.all(chosen_row >= scores_ref_np - 1e-4)
    chosen_col = m_np[nn21_np, np.arange(N2)]
    assert np.all(chosen_col >= colscores_ref_np - 1e-4)

    assert matches.ndim == 2 and matches.shape[1] == 4 and matches.shape[0] > 0

    print("KERNEL_OK")
</pallas_src>

<mosaic_0001>
module attributes {stable_mosaic.version = 11 : i64} {
  func.func @_mnn_tiled_kernel(%arg0: i32, %arg1: i32, %arg2: memref<256x128xf32, #tpu.memory_space<vmem>>, %arg3: memref<256x128xf32, #tpu.memory_space<vmem>>, %arg4: memref<256x1xi32, #tpu.memory_space<vmem>>, %arg5: memref<256x1xf32, #tpu.memory_space<vmem>>, %arg6: memref<1x1x256xf32, #tpu.memory_space<vmem>>, %arg7: memref<1x1x256xi32, #tpu.memory_space<vmem>>) attributes {dimension_semantics = [#tpu.dimension_semantics<parallel>, #tpu.dimension_semantics<arbitrary>], iteration_bounds = array<i64: 2, 2>, scalar_prefetch = 0 : i64, scratch_operands = 0 : i64, tpu.core_type = #tpu.core_type<tc>, window_params = [{transform_indices = @transform_0, window_bounds = array<i64: 256, 128>}, {transform_indices = @transform_1, window_bounds = array<i64: 256, 128>}, {transform_indices = @transform_2, window_bounds = array<i64: 256, 1>}, {transform_indices = @transform_3, window_bounds = array<i64: 256, 1>}, {transform_indices = @transform_4, window_bounds = array<i64: 1, 1, 256>}, {transform_indices = @transform_5, window_bounds = array<i64: 1, 1, 256>}]} {
    %c0_i32 = arith.constant 0 : i32
    %0 = arith.cmpi eq, %arg1, %c0_i32 : i32
    %1 = arith.extui %0 : i1 to i32
    %c0_i32_0 = arith.constant 0 : i32
    %2 = arith.cmpi ne, %1, %c0_i32_0 : i32
    scf.if %2 {
      %cst_26 = arith.constant 0xFF800000 : f32
      %47 = vector.broadcast %cst_26 : f32 to vector<256x1xf32>
      %c0_27 = arith.constant 0 : index
      %c0_28 = arith.constant 0 : index
      %48 = vector.load %arg5[%c0_27, %c0_28] : memref<256x1xf32, #tpu.memory_space<vmem>>, vector<256x1xf32>
      tpu.vector_store %arg5[%c0_27, %c0_28], %47 {strides = array<i32>} : memref<256x1xf32, #tpu.memory_space<vmem>>, vector<256x1xf32>,
      %c0_i32_29 = arith.constant 0 : i32
      %49 = vector.broadcast %c0_i32_29 : i32 to vector<256x1xi32>
      %c0_30 = arith.constant 0 : index
      %c0_31 = arith.constant 0 : index
      %50 = vector.load %arg4[%c0_30, %c0_31] : memref<256x1xi32, #tpu.memory_space<vmem>>, vector<256x1xi32>
      tpu.vector_store %arg4[%c0_30, %c0_31], %49 {strides = array<i32>} : memref<256x1xi32, #tpu.memory_space<vmem>>, vector<256x1xi32>,
    } else {
    }
    %c0 = arith.constant 0 : index
    %c0_1 = arith.constant 0 : index
    %3 = vector.load %arg2[%c0, %c0_1] : memref<256x128xf32, #tpu.memory_space<vmem>>, vector<256x128xf32>
    %c0_2 = arith.constant 0 : index
    %c0_3 = arith.constant 0 : index
    %4 = vector.load %arg3[%c0_2, %c0_3] : memref<256x128xf32, #tpu.memory_space<vmem>>, vector<256x128xf32>
    %cst = arith.constant dense<0.000000e+00> : vector<256x256xf32>
    %5 = tpu.matmul %3, %4, %cst {dimension_numbers = #tpu.dot_dimension_numbers<[1], [1], [0], [0], [0, 0, 1, 0], [], []>} : vector<256x128xf32>, vector<256x128xf32>, vector<256x256xf32> -> vector<256x256xf32>
    %c256_i32 = arith.constant 256 : i32
    %6 = arith.muli %arg0, %c256_i32 : i32
    %7 = tpu.iota {dimensions = array<i32: 0>} : vector<256x1xi32>
    %8 = vector.broadcast %6 : i32 to vector<256x1xi32>
    %9 = arith.addi %8, %7 : vector<256x1xi32>
    %c256_i32_4 = arith.constant 256 : i32
    %10 = arith.muli %arg1, %c256_i32_4 : i32
    %11 = tpu.iota {dimensions = array<i32: 1>} : vector<1x256xi32>
    %12 = vector.broadcast %10 : i32 to vector<1x256xi32>
    %13 = arith.addi %12, %11 : vector<1x256xi32>
    %c512_i32 = arith.constant 512 : i32
    %14 = vector.broadcast %c512_i32 : i32 to vector<256x1xi32>
    %15 = arith.cmpi slt, %9, %14 : vector<256x1xi32>
    %c384_i32 = arith.constant 384 : i32
    %16 = vector.broadcast %c384_i32 : i32 to vector<1x256xi32>
    %17 = arith.cmpi slt, %13, %16 : vector<1x256xi32>
    %18 = vector.broadcast %15 : vector<256x1xi1> to vector<256x256xi1>
    %19 = vector.broadcast %17 : vector<1x256xi1> to vector<256x256xi1>
    %20 = arith.andi %18, %19 : vector<256x256xi1>
    %cst_5 = arith.constant 0xFF800000 : f32
    %21 = vector.broadcast %cst_5 : f32 to vector<256x256xf32>
    %22 = arith.select %20, %5, %21 : vector<256x256xi1>, vector<256x256xf32>
    %cst_6 = arith.constant dense<0xFF800000> : vector<256xf32>
    %23 = vector.multi_reduction <maximumf>, %22, %cst_6 [1] : vector<256x256xf32> to vector<256xf32>
    %24 = vector.shape_cast %23 : vector<256xf32> to vector<256x1xf32>
    %c256_i32_7 = arith.constant 256 : i32
    %25 = arith.muli %arg1, %c256_i32_7 : i32
    %26 = tpu.reduce_index %22 {axis = 1 : i32, kind = #tpu.reduction_kind<arg_max>} : vector<256x256xf32> -> vector<256xi32>
    %27 = vector.broadcast %25 : i32 to vector<256xi32>
    %28 = arith.addi %27, %26 : vector<256xi32>
    %29 = vector.shape_cast %28 : vector<256xi32> to vector<256x1xi32>
    %c0_8 = arith.constant 0 : index
    %c0_9 = arith.constant 0 : index
    %30 = vector.load %arg5[%c0_8, %c0_9] : memref<256x1xf32, #tpu.memory_space<vmem>>, vector<256x1xf32>
    %31 = arith.cmpf ogt, %24, %30 : vector<256x1xf32>
    %c0_10 = arith.constant 0 : index
    %c0_11 = arith.constant 0 : index
    %32 = vector.load %arg5[%c0_10, %c0_11] : memref<256x1xf32, #tpu.memory_space<vmem>>, vector<256x1xf32>
    %33 = arith.select %31, %24, %32 : vector<256x1xi1>, vector<256x1xf32>
    %c0_12 = arith.constant 0 : index
    %c0_13 = arith.constant 0 : index
    %34 = vector.load %arg5[%c0_12, %c0_13] : memref<256x1xf32, #tpu.memory_space<vmem>>, vector<256x1xf32>
    tpu.vector_store %arg5[%c0_12, %c0_13], %33 {strides = array<i32>} : memref<256x1xf32, #tpu.memory_space<vmem>>, vector<256x1xf32>,
    %c0_14 = arith.constant 0 : index
    %c0_15 = arith.constant 0 : index
    %35 = vector.load %arg4[%c0_14, %c0_15] : memref<256x1xi32, #tpu.memory_space<vmem>>, vector<256x1xi32>
    %36 = arith.select %31, %29, %35 : vector<256x1xi1>, vector<256x1xi32>
    %c0_16 = arith.constant 0 : index
    %c0_17 = arith.constant 0 : index
    %37 = vector.load %arg4[%c0_16, %c0_17] : memref<256x1xi32, #tpu.memory_space<vmem>>, vector<256x1xi32>
    tpu.vector_store %arg4[%c0_16, %c0_17], %36 {strides = array<i32>} : memref<256x1xi32, #tpu.memory_space<vmem>>, vector<256x1xi32>,
    %cst_18 = arith.constant dense<0xFF800000> : vector<256xf32>
    %38 = vector.multi_reduction <maximumf>, %22, %cst_18 [0] : vector<256x256xf32> to vector<256xf32>
    %c256_i32_19 = arith.constant 256 : i32
    %39 = arith.muli %arg0, %c256_i32_19 : i32
    %40 = tpu.reduce_index %22 {axis = 0 : i32, kind = #tpu.reduction_kind<arg_max>} : vector<256x256xf32> -> vector<256xi32>
    %41 = vector.broadcast %39 : i32 to vector<256xi32>
    %42 = arith.addi %41, %40 : vector<256xi32>
    %43 = vector.shape_cast %38 : vector<256xf32> to vector<1x1x256xf32>
    %c0_20 = arith.constant 0 : index
    %c0_21 = arith.constant 0 : index
    %c0_22 = arith.constant 0 : index
    %44 = vector.load %arg6[%c0_20, %c0_21, %c0_22] : memref<1x1x256xf32, #tpu.memory_space<vmem>>, vector<1x1x256xf32>
    tpu.vector_store %arg6[%c0_20, %c0_21, %c0_22], %43 {strides = array<i32>} : memref<1x1x256xf32, #tpu.memory_space<vmem>>, vector<1x1x256xf32>,
    %45 = vector.shape_cast %42 : vector<256xi32> to vector<1x1x256xi32>
    %c0_23 = arith.constant 0 : index
    %c0_24 = arith.constant 0 : index
    %c0_25 = arith.constant 0 : index
    %46 = vector.load %arg7[%c0_23, %c0_24, %c0_25] : memref<1x1x256xi32, #tpu.memory_space<vmem>>, vector<1x1x256xi32>
    tpu.vector_store %arg7[%c0_23, %c0_24, %c0_25], %45 {strides = array<i32>} : memref<1x1x256xi32, #tpu.memory_space<vmem>>, vector<1x1x256xi32>,
    return
  }
  func.func @transform_0(%arg0: i32, %arg1: i32) -> (i32, i32) {
    %c0_i32 = arith.constant 0 : i32
    %c0_i32_0 = arith.constant 0 : i32
    return %arg0, %c0_i32 : i32, i32
  }
  func.func @transform_1(%arg0: i32, %arg1: i32) -> (i32, i32) {
    %c0_i32 = arith.constant 0 : i32
    %c0_i32_0 = arith.constant 0 : i32
    return %arg1, %c0_i32 : i32, i32
  }
  func.func @transform_2(%arg0: i32, %arg1: i32) -> (i32, i32) {
    %c0_i32 = arith.constant 0 : i32
    %c0_i32_0 = arith.constant 0 : i32
    return %arg0, %c0_i32 : i32, i32
  }
  func.func @transform_3(%arg0: i32, %arg1: i32) -> (i32, i32) {
    %c0_i32 = arith.constant 0 : i32
    %c0_i32_0 = arith.constant 0 : i32
    return %arg0, %c0_i32 : i32, i32
  }
  func.func @transform_4(%arg0: i32, %arg1: i32) -> (i32, i32, i32) {
    %c0_i32 = arith.constant 0 : i32
    %c0_i32_0 = arith.constant 0 : i32
    return %arg0, %c0_i32, %arg1 : i32, i32, i32
  }
  func.func @transform_5(%arg0: i32, %arg1: i32) -> (i32, i32, i32) {
    %c0_i32 = arith.constant 0 : i32
    %c0_i32_0 = arith.constant 0 : i32
    return %arg0, %c0_i32, %arg1 : i32, i32, i32
  }
}

module attributes {stable_mosaic.version = 11 : i64} {
  func.func @_l2norm_kernel(%arg0: i32, %arg1: memref<256x128xf32, #tpu.memory_space<vmem>>, %arg2: memref<256x128xf32, #tpu.memory_space<vmem>>) attributes {dimension_semantics = [#tpu.dimension_semantics<parallel>], iteration_bounds = array<i64: 2>, scalar_prefetch = 0 : i64, scratch_operands = 0 : i64, tpu.core_type = #tpu.core_type<tc>, window_params = [{transform_indices = @transform_0, window_bounds = array<i64: 256, 128>}, {transform_indices = @transform_1, window_bounds = array<i64: 256, 128>}]} {
    %c0 = arith.constant 0 : index
    %c0_0 = arith.constant 0 : index
    %0 = vector.load %arg1[%c0, %c0_0] : memref<256x128xf32, #tpu.memory_space<vmem>>, vector<256x128xf32>
    %1 = arith.mulf %0, %0 : vector<256x128xf32>
    %cst = arith.constant dense<0.000000e+00> : vector<256xf32>
    %2 = vector.multi_reduction <add>, %1, %cst [1] : vector<256x128xf32> to vector<256xf32>
    %3 = vector.shape_cast %2 : vector<256xf32> to vector<256x1xf32>
    %cst_1 = arith.constant 9.99999996E-13 : f32
    %4 = vector.broadcast %cst_1 : f32 to vector<256x1xf32>
    %5 = arith.addf %3, %4 : vector<256x1xf32>
    %6 = math.rsqrt %5 : vector<256x1xf32>
    %7 = vector.broadcast %6 : vector<256x1xf32> to vector<256x128xf32>
    %8 = arith.mulf %0, %7 : vector<256x128xf32>
    %c0_2 = arith.constant 0 : index
    %c0_3 = arith.constant 0 : index
    %9 = vector.load %arg2[%c0_2, %c0_3] : memref<256x128xf32, #tpu.memory_space<vmem>>, vector<256x128xf32>
    tpu.vector_store %arg2[%c0_2, %c0_3], %8 {strides = array<i32>} : memref<256x128xf32, #tpu.memory_space<vmem>>, vector<256x128xf32>,
    return
  }
  func.func @transform_0(%arg0: i32) -> (i32, i32) {
    %c0_i32 = arith.constant 0 : i32
    %c0_i32_0 = arith.constant 0 : i32
    return %arg0, %c0_i32 : i32, i32
  }
  func.func @transform_1(%arg0: i32) -> (i32, i32) {
    %c0_i32 = arith.constant 0 : i32
    %c0_i32_0 = arith.constant 0 : i32
    return %arg0, %c0_i32 : i32, i32
  }
}

</mosaic_0001>

<llo_original>
// kernel: _sift_device.4
$region0: #{_sift_device.4}
  #allocation0 [shape = 'u32[]', space=smem, size = 0x4, offset = 0x4, fixed_abs, tag = 'smem constant byte address 0x4 - core index']
  #allocation1 [shape = 'u32[72,128]{1,0:T(1,128)}', space=vmem, size = 0x9000, scoped, tag = 'internal scratch']
  %s0 = inlined_call_operand.vmem [shape: f32[512,128], index: 0, kind: input, shape index: {}]
  %s1 = inlined_call_operand.vmem [shape: f32[512,128], index: 1, kind: output, shape index: {}]
  %s2 = sld [smem:[#allocation0]]
  $region37: #{_sift_device.4} parent=0
    _
  %s4 = ssub.s32 1, %s2
  %s5 = scalar_select 0, %s4, %s2
  loop: start=0, step=1, limit=4
  $region2: #{_sift_device.4} parent=0 // loop_pre_header
    _
  $region3: #{_sift_device.4} parent=0 // loop_header
    %s7 = sphi 0, %s11
    %p8 = scmp.ge.s32.totalorder %s7, 4
    %s17 = sphi 0, %s19
    %s20 = sphi 0, %s17
    %s21 = sphi 0, %s20
    %s37 = sphi 0, %s21
    %s43 = sphi 0, %s45
    %s46 = sphi 0, %s43
    %s47 = sphi 0, %s46
    %s63 = sphi 0, %s47
  $region4: #{_sift_device.4} parent=0 // loop_header_branch
    %10 = sbr.rel (%p8) target = $region8
  $region5: #{_sift_device.4} parent=0 // loop_body
    %s12 = ssub.s32 %s7, 1
    %s13 = ssub.s32 %s7, 2
    %s14 = sadd.s32 %s7, 1
    %s15 = ssub.s32 %s7, %s14
    %p16 = scmp.eq.s32.totalorder %s15, 0
    %s18 = sadd.s32 %s17, 1
    %s19 = scalar_select %p16, %s17, %s18
    %p22 = pneg %p16
    %p23 = scmp.eq.s32.totalorder %s7, 1
    %p24 = por %p22, %p23
    %p25 = scmp.ne.s32.totalorder %s17, %s20
    %p26 = scmp.eq.s32.totalorder %s7, 0
    %p27 = por %p25, %p26
    %p28 = scmp.ne.s32.totalorder %s17, %s20
    %p29 = scmp.eq.s32.totalorder %s12, 1
    %p30 = por %p28, %p29
    %p31 = scmp.ne.s32.totalorder %s20, %s21
    %p32 = scmp.eq.s32.totalorder %s12, 0
    %p33 = por %p31, %p32
    %p34 = scmp.ne.s32.totalorder %s20, %s21
    %p35 = scmp.eq.s32.totalorder %s13, 1
    %p36 = por %p34, %p35
    %p38 = scmp.ne.s32.totalorder %s21, %s37
    %p39 = scmp.eq.s32.totalorder %s13, 0
    %p40 = por %p38, %p39
    %s41 = ssub.s32 %s7, %s14
    %p42 = scmp.eq.s32.totalorder %s41, 0
    %s44 = sadd.s32 %s43, 1
    %s45 = scalar_select %p42, %s43, %s44
    %p48 = pneg %p42
    %p49 = scmp.eq.s32.totalorder %s7, 1
    %p50 = por %p48, %p49
    %p51 = scmp.ne.s32.totalorder %s43, %s46
    %p52 = scmp.eq.s32.totalorder %s7, 0
    %p53 = por %p51, %p52
    %p54 = scmp.ne.s32.totalorder %s43, %s46
    %p55 = scmp.eq.s32.totalorder %s12, 1
    %p56 = por %p54, %p55
    %p57 = scmp.ne.s32.totalorder %s46, %s47
    %p58 = scmp.eq.s32.totalorder %s12, 0
    %p59 = por %p57, %p58
    %p60 = scmp.ne.s32.totalorder %s46, %s47
    %p61 = scmp.eq.s32.totalorder %s13, 1
    %p62 = por %p60, %p61
    %p64 = scmp.ne.s32.totalorder %s47, %s63
    %p65 = scmp.eq.s32.totalorder %s13, 0
    %p66 = por %p64, %p65
    %p67 = scmp.le.s32.totalorder 1, %s7
    %p68 = scmp.lt.s32.totalorder %s7, 3
    %p69 = pnand %p67, %p68
    %p70 = pneg %p69
    // Predicated region
    $region9: #{_sift_device.4} parent=5 // pred_check
      _
    $region10: #{_sift_device.4} parent=5 // pred_check_branch
      %72 = sbr.rel (%p69) target = $region12
    $region11: #{_sift_device.4} parent=5 // pred_region
      %s73 = ssub.s32 %s7, 1
    $region12: #{_sift_device.4} parent=5 // pred_fallthru
      _
    %p74 = scmp.lt.s32.totalorder %s7, 2
    // Predicated region
    $region13: #{_sift_device.4} parent=5 // pred_check
      %p75 = pneg %p74
    $region14: #{_sift_device.4} parent=5 // pred_check_branch
      %77 = sbr.rel (%p75) target = $region16
    $region15: #{_sift_device.4} parent=5 // pred_region
      // Predicated region
      $region17: #{_sift_device.4} parent=15 // pred_check
        %p78 = pneg %p27
      $region18: #{_sift_device.4} parent=15 // pred_check_branch
        %80 = sbr.rel (%p78) target = $region20
      $region19: #{_sift_device.4} parent=15 // pred_region
        %s81 = smul.u32 32, %s7
        %p82 = scmp.lt.s32.totalorder %s81, 63
        %s83 = scalar_select %p82, %s81, 63
        %s84 = smul.addr %s83, 8
        %s85 = scalar_lea.vmem %s0, %s84
        %s86 = smul.u32 32, %s7
      $region20: #{_sift_device.4} parent=15 // pred_fallthru
        _
    $region16: #{_sift_device.4} parent=5 // pred_fallthru
      _
    %p87 = scmp.le.s32.totalorder 1, %s7
    %p88 = scmp.lt.s32.totalorder %s7, 3
    %p89 = pnand %p87, %p88
    %p90 = pneg %p89
    // Predicated region
    $region21: #{_sift_device.4} parent=5 // pred_check
      _
    $region22: #{_sift_device.4} parent=5 // pred_check_branch
      %92 = sbr.rel (%p89) target = $region24
    $region23: #{_sift_device.4} parent=5 // pred_region
      %s93 = ssub.s32 %s7, 1
      %s94 = smul.u32 32, %s12
      %p95 = scmp.lt.s32.totalorder %s94, 63
      %s96 = scalar_select %p95, %s94, 63
      %s97 = smul.addr %s96, 8
      %s98 = scalar_lea.vmem %s0, %s97
      %p99 = pneg %p33
      %p100 = pneg %p30
      %p101 = pneg %p59
      %p102 = pneg %p56
      %s103 = smul.u32 32, %s12
      %p104 = scmp.lt.s32.totalorder %s103, 63
      %s105 = scalar_select %p104, %s103, 63
      %s106 = smul.addr %s105, 8
      %s107 = scalar_lea.vmem %s1, %s106
      %s108 = smul.u32 32, %s12
      %p109 = scmp.lt.s32.totalorder %s108, 63
      %s110 = scalar_select %p109, %s108, 63
      %s111 = smul.addr %s110, 8
      %s112 = scalar_lea.vmem %s0, %s111
      %s113 = smul.u32 32, %s12
      %s114 = smul.u32 32, %s12
      %p115 = scmp.lt.s32.totalorder %s114, 63
      %s116 = scalar_select %p115, %s114, 63
      %s117 = smul.addr %s116, 8
      %s118 = scalar_lea.vmem %s1, %s117
      %s119 = smul.u32 32, %s12
      %v120 = vld [vmem:[%s112] sm:$0xff]
      %v121 = vld [vmem:[%s112 + $0x8] sm:$0xff]
      %v122 = vld [vmem:[%s112 + $0x10] sm:$0xff]
      %v123 = vld [vmem:[%s112 + $0x18] sm:$0xff]
      %v124 = vld [vmem:[%s112 + $0x20] sm:$0xff]
      %v125 = vld [vmem:[%s112 + $0x28] sm:$0xff]
      %v126 = vld [vmem:[%s112 + $0x30] sm:$0xff]
      %v127 = vld [vmem:[%s112 + $0x38] sm:$0xff]
      %v128 = vld [vmem:[%s112 + $0x40] sm:$0xff]
      %v129 = vld [vmem:[%s112 + $0x48] sm:$0xff]
      %v130 = vld [vmem:[%s112 + $0x50] sm:$0xff]
      %v131 = vld [vmem:[%s112 + $0x58] sm:$0xff]
      %v132 = vld [vmem:[%s112 + $0x60] sm:$0xff]
      %v133 = vld [vmem:[%s112 + $0x68] sm:$0xff]
      %v134 = vld [vmem:[%s112 + $0x70] sm:$0xff]
      %v135 = vld [vmem:[%s112 + $0x78] sm:$0xff]
      %v136 = vld [vmem:[%s112 + $0x80] sm:$0xff]
      %v137 = vld [vmem:[%s112 + $0x88] sm:$0xff]
      %v138 = vld [vmem:[%s112 + $0x90] sm:$0xff]
      %v139 = vld [vmem:[%s112 + $0x98] sm:$0xff]
      %v140 = vld [vmem:[%s112 + $0xa0] sm:$0xff]
      %v141 = vld [vmem:[%s112 + $0xa8] sm:$0xff]
      %v142 = vld [vmem:[%s112 + $0xb0] sm:$0xff]
      %v143 = vld [vmem:[%s112 + $0xb8] sm:$0xff]
      %v144 = vld [vmem:[%s112 + $0xc0] sm:$0xff]
      %v145 = vld [vmem:[%s112 + $0xc8] sm:$0xff]
      %v146 = vld [vmem:[%s112 + $0xd0] sm:$0xff]
      %v147 = vld [vmem:[%s112 + $0xd8] sm:$0xff]
      %v148 = vld [vmem:[%s112 + $0xe0] sm:$0xff]
      %v149 = vld [vmem:[%s112 + $0xe8] sm:$0xff]
      %v150 = vld [vmem:[%s112 + $0xf0] sm:$0xff]
      %v151 = vld [vmem:[%s112 + $0xf8] sm:$0xff]
      %v152 = vmul.f32 %v120, %v120
      %v153 = vmul.f32 %v121, %v121
      %v154 = vmul.f32 %v122, %v122
      %v155 = vmul.f32 %v123, %v123
      %v156 = vmul.f32 %v124, %v124
      %v157 = vmul.f32 %v125, %v125
      %v158 = vmul.f32 %v126, %v126
      %v159 = vmul.f32 %v127, %v127
      %v160 = vmul.f32 %v128, %v128
      %v161 = vmul.f32 %v129, %v129
      %v162 = vmul.f32 %v130, %v130
      %v163 = vmul.f32 %v131, %v131
      %v164 = vmul.f32 %v132, %v132
      %v165 = vmul.f32 %v133, %v133
      %v166 = vmul.f32 %v134, %v134
      %v167 = vmul.f32 %v135, %v135
      %v168 = vmul.f32 %v136, %v136
      %v169 = vmul.f32 %v137, %v137
      %v170 = vmul.f32 %v138, %v138
      %v171 = vmul.f32 %v139, %v139
      %v172 = vmul.f32 %v140, %v140
      %v173 = vmul.f32 %v141, %v141
      %v174 = vmul.f32 %v142, %v142
      %v175 = vmul.f32 %v143, %v143
      %v176 = vmul.f32 %v144, %v144
      %v177 = vmul.f32 %v145, %v145
      %v178 = vmul.f32 %v146, %v146
      %v179 = vmul.f32 %v147, %v147
      %v180 = vmul.f32 %v148, %v148
      %v181 = vmul.f32 %v149, %v149
      %v182 = vmul.f32 %v150, %v150
      %v183 = vmul.f32 %v151, %v151
      %184 = vadd.xlane.f32.xlu0 %v152
      %v185 = vpop.xlane.xlu0 %184
      %186 = vadd.xlane.f32.xlu0 %v153
      %v187 = vpop.xlane.xlu0 %186
      %188 = vadd.xlane.f32.xlu0 %v154
      %v189 = vpop.xlane.xlu0 %188
      %190 = vadd.xlane.f32.xlu0 %v155
      %v191 = vpop.xlane.xlu0 %190
      %192 = vadd.xlane.f32.xlu0 %v156
      %v193 = vpop.xlane.xlu0 %192
      %194 = vadd.xlane.f32.xlu0 %v157
      %v195 = vpop.xlane.xlu0 %194
      %196 = vadd.xlane.f32.xlu0 %v158
      %v197 = vpop.xlane.xlu0 %196
      %198 = vadd.xlane.f32.xlu0 %v159
      %v199 = vpop.xlane.xlu0 %198
      %200 = vadd.xlane.f32.xlu0 %v160
      %v201 = vpop.xlane.xlu0 %200
      %202 = vadd.xlane.f32.xlu0 %v161
      %v203 = vpop.xlane.xlu0 %202
      %204 = vadd.xlane.f32.xlu0 %v162
      %v205 = vpop.xlane.xlu0 %204
      %206 = vadd.xlane.f32.xlu0 %v163
      %v207 = vpop.xlane.xlu0 %206
      %208 = vadd.xlane.f32.xlu0 %v164
      %v209 = vpop.xlane.xlu0 %208
      %210 = vadd.xlane.f32.xlu0 %v165
      %v211 = vpop.xlane.xlu0 %210
      %212 = vadd.xlane.f32.xlu0 %v166
      %v213 = vpop.xlane.xlu0 %212
      %214 = vadd.xlane.f32.xlu0 %v167
      %v215 = vpop.xlane.xlu0 %214
      %216 = vadd.xlane.f32.xlu0 %v168
      %v217 = vpop.xlane.xlu0 %216
      %218 = vadd.xlane.f32.xlu0 %v169
      %v219 = vpop.xlane.xlu0 %218
      %220 = vadd.xlane.f32.xlu0 %v170
      %v221 = vpop.xlane.xlu0 %220
      %222 = vadd.xlane.f32.xlu0 %v171
      %v223 = vpop.xlane.xlu0 %222
      %224 = vadd.xlane.f32.xlu0 %v172
      %v225 = vpop.xlane.xlu0 %224
      %226 = vadd.xlane.f32.xlu0 %v173
      %v227 = vpop.xlane.xlu0 %226
      %228 = vadd.xlane.f32.xlu0 %v174
      %v229 = vpop.xlane.xlu0 %228
      %230 = vadd.xlane.f32.xlu0 %v175
      %v231 = vpop.xlane.xlu0 %230
      %232 = vadd.xlane.f32.xlu0 %v176
      %v233 = vpop.xlane.xlu0 %232
      %234 = vadd.xlane.f32.xlu0 %v177
      %v235 = vpop.xlane.xlu0 %234
      %236 = vadd.xlane.f32.xlu0 %v178
      %v237 = vpop.xlane.xlu0 %236
      %238 = vadd.xlane.f32.xlu0 %v179
      %v239 = vpop.xlane.xlu0 %238
      %240 = vadd.xlane.f32.xlu0 %v180
      %v241 = vpop.xlane.xlu0 %240
      %242 = vadd.xlane.f32.xlu0 %v181
      %v243 = vpop.xlane.xlu0 %242
      %244 = vadd.xlane.f32.xlu0 %v182
      %v245 = vpop.xlane.xlu0 %244
      %246 = vadd.xlane.f32.xlu0 %v183
      %v247 = vpop.xlane.xlu0 %246
      %v248 = vadd.f32 %v185, 1e-12
      %v249 = vadd.f32 %v187, 1e-12
      %v250 = vadd.f32 %v189, 1e-12
      %v251 = vadd.f32 %v191, 1e-12
      %v252 = vadd.f32 %v193, 1e-12
      %v253 = vadd.f32 %v195, 1e-12
      %v254 = vadd.f32 %v197, 1e-12
      %v255 = vadd.f32 %v199, 1e-12
      %v256 = vadd.f32 %v201, 1e-12
      %v257 = vadd.f32 %v203, 1e-12
      %v258 = vadd.f32 %v205, 1e-12
      %v259 = vadd.f32 %v207, 1e-12
      %v260 = vadd.f32 %v209, 1e-12
      %v261 = vadd.f32 %v211, 1e-12
      %v262 = vadd.f32 %v213, 1e-12
      %v263 = vadd.f32 %v215, 1e-12
      %v264 = vadd.f32 %v217, 1e-12
      %v265 = vadd.f32 %v219, 1e-12
      %v266 = vadd.f32 %v221, 1e-12
      %v267 = vadd.f32 %v223, 1e-12
      %v268 = vadd.f32 %v225, 1e-12
      %v269 = vadd.f32 %v227, 1e-12
      %v270 = vadd.f32 %v229, 1e-12
      %v271 = vadd.f32 %v231, 1e-12
      %v272 = vadd.f32 %v233, 1e-12
      %v273 = vadd.f32 %v235, 1e-12
      %v274 = vadd.f32 %v237, 1e-12
      %v275 = vadd.f32 %v239, 1e-12
      %v276 = vadd.f32 %v241, 1e-12
      %v277 = vadd.f32 %v243, 1e-12
      %v278 = vadd.f32 %v245, 1e-12
      %v279 = vadd.f32 %v247, 1e-12
      %v280 = vrsqrt.pop %v248
      %v281 = vmul.f32 %v280, %v248
      %v282 = vmul.f32 %v281, %v280
      %v283 = vmul.f32 0.5, %v282
      %v284 = vsub.f32 1.5, %v283
      %v285 = vmul.f32 %v280, %v284
      %vm286 = vweird.f32 %v248
      %vm287 = vweird.f32 %v280
      %vm288 = vmor %vm286, %vm287
      %v289 = vsel %vm288, %v280, %v285
      %v290 = vrsqrt.pop %v249
      %v291 = vmul.f32 %v290, %v249
      %v292 = vmul.f32 %v291, %v290
      %v293 = vmul.f32 0.5, %v292
      %v294 = vsub.f32 1.5, %v293
      %v295 = vmul.f32 %v290, %v294
      %vm296 = vweird.f32 %v249
      %vm297 = vweird.f32 %v290
      %vm298 = vmor %vm296, %vm297
      %v299 = vsel %vm298, %v290, %v295
      %v300 = vrsqrt.pop %v250
      %v301 = vmul.f32 %v300, %v250
      %v302 = vmul.f32 %v301, %v300
      %v303 = vmul.f32 0.5, %v302
      %v304 = vsub.f32 1.5, %v303
      %v305 = vmul.f32 %v300, %v304
      %vm306 = vweird.f32 %v250
      %vm307 = vweird.f32 %v300
      %vm308 = vmor %vm306, %vm307
      %v309 = vsel %vm308, %v300, %v305
      %v310 = vrsqrt.pop %v251
      %v311 = vmul.f32 %v310, %v251
      %v312 = vmul.f32 %v311, %v310
      %v313 = vmul.f32 0.5, %v312
      %v314 = vsub.f32 1.5, %v313
      %v315 = vmul.f32 %v310, %v314
      %vm316 = vweird.f32 %v251
      %vm317 = vweird.f32 %v310
      %vm318 = vmor %vm316, %vm317
      %v319 = vsel %vm318, %v310, %v315
      %v320 = vrsqrt.pop %v252
      %v321 = vmul.f32 %v320, %v252
      %v322 = vmul.f32 %v321, %v320
      %v323 = vmul.f32 0.5, %v322
      %v324 = vsub.f32 1.5, %v323
      %v325 = vmul.f32 %v320, %v324
      %vm326 = vweird.f32 %v252
      %vm327 = vweird.f32 %v320
      %vm328 = vmor %vm326, %vm327
      %v329 = vsel %vm328, %v320, %v325
      %v330 = vrsqrt.pop %v253
      %v331 = vmul.f32 %v330, %v253
      %v332 = vmul.f32 %v331, %v330
      %v333 = vmul.f32 0.5, %v332
      %v334 = vsub.f32 1.5, %v333
      %v335 = vmul.f32 %v330, %v334
      %vm336 = vweird.f32 %v253
      %vm337 = vweird.f32 %v330
      %vm338 = vmor %vm336, %vm337
      %v339 = vsel %vm338, %v330, %v335
      %v340 = vrsqrt.pop %v254
      %v341 = vmul.f32 %v340, %v254
      %v342 = vmul.f32 %v341, %v340
      %v343 = vmul.f32 0.5, %v342
      %v344 = vsub.f32 1.5, %v343
      %v345 = vmul.f32 %v340, %v344
      %vm346 = vweird.f32 %v254
      %vm347 = vweird.f32 %v340
      %vm348 = vmor %vm346, %vm347
      %v349 = vsel %vm348, %v340, %v345
      %v350 = vrsqrt.pop %v255
      %v351 = vmul.f32 %v350, %v255
      %v352 = vmul.f32 %v351, %v350
      %v353 = vmul.f32 0.5, %v352
      %v354 = vsub.f32 1.5, %v353
      %v355 = vmul.f32 %v350, %v354
      %vm356 = vweird.f32 %v255
      %vm357 = vweird.f32 %v350
      %vm358 = vmor %vm356, %vm357
      %v359 = vsel %vm358, %v350, %v355
      %v360 = vrsqrt.pop %v256
      %v361 = vmul.f32 %v360, %v256
      %v362 = vmul.f32 %v361, %v360
      %v363 = vmul.f32 0.5, %v362
      %v364 = vsub.f32 1.5, %v363
      %v365 = vmul.f32 %v360, %v364
      %vm366 = vweird.f32 %v256
      %vm367 = vweird.f32 %v360
      %vm368 = vmor %vm366, %vm367
      %v369 = vsel %vm368, %v360, %v365
      %v370 = vrsqrt.pop %v257
      %v371 = vmul.f32 %v370, %v257
      %v372 = vmul.f32 %v371, %v370
      %v373 = vmul.f32 0.5, %v372
      %v374 = vsub.f32 1.5, %v373
      %v375 = vmul.f32 %v370, %v374
      %vm376 = vweird.f32 %v257
      %vm377 = vweird.f32 %v370
      %vm378 = vmor %vm376, %vm377
      %v379 = vsel %vm378, %v370, %v375
      %v380 = vrsqrt.pop %v258
      %v381 = vmul.f32 %v380, %v258
      %v382 = vmul.f32 %v381, %v380
      %v383 = vmul.f32 0.5, %v382
      %v384 = vsub.f32 1.5, %v383
      %v385 = vmul.f32 %v380, %v384
      %vm386 = vweird.f32 %v258
      %vm387 = vweird.f32 %v380
      %vm388 = vmor %vm386, %vm387
      %v389 = vsel %vm388, %v380, %v385
      %v390 = vrsqrt.pop %v259
      %v391 = vmul.f32 %v390, %v259
      %v392 = vmul.f32 %v391, %v390
      %v393 = vmul.f32 0.5, %v392
      %v394 = vsub.f32 1.5, %v393
      %v395 = vmul.f32 %v390, %v394
      %vm396 = vweird.f32 %v259
      %vm397 = vweird.f32 %v390
      %vm398 = vmor %vm396, %vm397
      %v399 = vsel %vm398, %v390, %v395
      %v400 = vrsqrt.pop %v260
      %v401 = vmul.f32 %v400, %v260
      %v402 = vmul.f32 %v401, %v400
      %v403 = vmul.f32 0.5, %v402
      %v404 = vsub.f32 1.5, %v403
      %v405 = vmul.f32 %v400, %v404
      %vm406 = vweird.f32 %v260
      %vm407 = vweird.f32 %v400
      %vm408 = vmor %vm406, %vm407
      %v409 = vsel %vm408, %v400, %v405
      %v410 = vrsqrt.pop %v261
      %v411 = vmul.f32 %v410, %v261
      %v412 = vmul.f32 %v411, %v410
      %v413 = vmul.f32 0.5, %v412
      %v414 = vsub.f32 1.5, %v413
      %v415 = vmul.f32 %v410, %v414
      %vm416 = vweird.f32 %v261
      %vm417 = vweird.f32 %v410
      %vm418 = vmor %vm416, %vm417
      %v419 = vsel %vm418, %v410, %v415
      %v420 = vrsqrt.pop %v262
      %v421 = vmul.f32 %v420, %v262
      %v422 = vmul.f32 %v421, %v420
      %v423 = vmul.f32 0.5, %v422
      %v424 = vsub.f32 1.5, %v423
      %v425 = vmul.f32 %v420, %v424
      %vm426 = vweird.f32 %v262
      %vm427 = vweird.f32 %v420
      %vm428 = vmor %vm426, %vm427
      %v429 = vsel %vm428, %v420, %v425
      %v430 = vrsqrt.pop %v263
      %v431 = vmul.f32 %v430, %v263
      %v432 = vmul.f32 %v431, %v430
      %v433 = vmul.f32 0.5, %v432
      %v434 = vsub.f32 1.5, %v433
      %v435 = vmul.f32 %v430, %v434
      %vm436 = vweird.f32 %v263
      %vm437 = vweird.f32 %v430
      %vm438 = vmor %vm436, %vm437
      %v439 = vsel %vm438, %v430, %v435
      %v440 = vrsqrt.pop %v264
      %v441 = vmul.f32 %v440, %v264
      %v442 = vmul.f32 %v441, %v440
      %v443 = vmul.f32 0.5, %v442
      %v444 = vsub.f32 1.5, %v443
      %v445 = vmul.f32 %v440, %v444
      %vm446 = vweird.f32 %v264
      %vm447 = vweird.f32 %v440
      %vm448 = vmor %vm446, %vm447
      %v449 = vsel %vm448, %v440, %v445
      %v450 = vrsqrt.pop %v265
      %v451 = vmul.f32 %v450, %v265
      %v452 = vmul.f32 %v451, %v450
      %v453 = vmul.f32 0.5, %v452
      %v454 = vsub.f32 1.5, %v453
      %v455 = vmul.f32 %v450, %v454
      %vm456 = vweird.f32 %v265
      %vm457 = vweird.f32 %v450
      %vm458 = vmor %vm456, %vm457
      %v459 = vsel %vm458, %v450, %v455
      %v460 = vrsqrt.pop %v266
      %v461 = vmul.f32 %v460, %v266
      %v462 = vmul.f32 %v461, %v460
      %v463 = vmul.f32 0.5, %v462
      %v464 = vsub.f32 1.5, %v463
      %v465 = vmul.f32 %v460, %v464
      %vm466 = vweird.f32 %v266
      %vm467 = vweird.f32 %v460
      %vm468 = vmor %vm466, %vm467
      %v469 = vsel %vm468, %v460, %v465
      %v470 = vrsqrt.pop %v267
      %v471 = vmul.f32 %v470, %v267
      %v472 = vmul.f32 %v471, %v470
      %v473 = vmul.f32 0.5, %v472
      %v474 = vsub.f32 1.5, %v473
      %v475 = vmul.f32 %v470, %v474
      %vm476 = vweird.f32 %v267
      %vm477 = vweird.f32 %v470
      %vm478 = vmor %vm476, %vm477
      %v479 = vsel %vm478, %v470, %v475
      %v480 = vrsqrt.pop %v268
      %v481 = vmul.f32 %v480, %v268
      %v482 = vmul.f32 %v481, %v480
      %v483 = vmul.f32 0.5, %v482
      %v484 = vsub.f32 1.5, %v483
      %v485 = vmul.f32 %v480, %v484
      %vm486 = vweird.f32 %v268
      %vm487 = vweird.f32 %v480
      %vm488 = vmor %vm486, %vm487
      %v489 = vsel %vm488, %v480, %v485
      %v490 = vrsqrt.pop %v269
      %v491 = vmul.f32 %v490, %v269
      %v492 = vmul.f32 %v491, %v490
      %v493 = vmul.f32 0.5, %v492
      %v494 = vsub.f32 1.5, %v493
      %v495 = vmul.f32 %v490, %v494
      %vm496 = vweird.f32 %v269
      %vm497 = vweird.f32 %v490
      %vm498 = vmor %vm496, %vm497
      %v499 = vsel %vm498, %v490, %v495
      %v500 = vrsqrt.pop %v270
      %v501 = vmul.f32 %v500, %v270
      %v502 = vmul.f32 %v501, %v500
      %v503 = vmul.f32 0.5, %v502
      %v504 = vsub.f32 1.5, %v503
      %v505 = vmul.f32 %v500, %v504
      %vm506 = vweird.f32 %v270
      %vm507 = vweird.f32 %v500
      %vm508 = vmor %vm506, %vm507
      %v509 = vsel %vm508, %v500, %v505
      %v510 = vrsqrt.pop %v271
      %v511 = vmul.f32 %v510, %v271
      %v512 = vmul.f32 %v511, %v510
      %v513 = vmul.f32 0.5, %v512
      %v514 = vsub.f32 1.5, %v513
      %v515 = vmul.f32 %v510, %v514
      %vm516 = vweird.f32 %v271
      %vm517 = vweird.f32 %v510
      %vm518 = vmor %vm516, %vm517
      %v519 = vsel %vm518, %v510, %v515
      %v520 = vrsqrt.pop %v272
      %v521 = vmul.f32 %v520, %v272
      %v522 = vmul.f32 %v521, %v520
      %v523 = vmul.f32 0.5, %v522
      %v524 = vsub.f32 1.5, %v523
      %v525 = vmul.f32 %v520, %v524
      %vm526 = vweird.f32 %v272
      %vm527 = vweird.f32 %v520
      %vm528 = vmor %vm526, %vm527
      %v529 = vsel %vm528, %v520, %v525
      %v530 = vrsqrt.pop %v273
      %v531 = vmul.f32 %v530, %v273
      %v532 = vmul.f32 %v531, %v530
      %v533 = vmul.f32 0.5, %v532
      %v534 = vsub.f32 1.5, %v533
      %v535 = vmul.f32 %v530, %v534
      %vm536 = vweird.f32 %v273
      %vm537 = vweird.f32 %v530
      %vm538 = vmor %vm536, %vm537
      %v539 = vsel %vm538, %v530, %v535
      %v540 = vrsqrt.pop %v274
      %v541 = vmul.f32 %v540, %v274
      %v542 = vmul.f32 %v541, %v540
      %v543 = vmul.f32 0.5, %v542
      %v544 = vsub.f32 1.5, %v543
      %v545 = vmul.f32 %v540, %v544
      %vm546 = vweird.f32 %v274
      %vm547 = vweird.f32 %v540
      %vm548 = vmor %vm546, %vm547
      %v549 = vsel %vm548, %v540, %v545
      %v550 = vrsqrt.pop %v275
      %v551 = vmul.f32 %v550, %v275
      %v552 = vmul.f32 %v551, %v550
      %v553 = vmul.f32 0.5, %v552
      %v554 = vsub.f32 1.5, %v553
      %v555 = vmul.f32 %v550, %v554
      %vm556 = vweird.f32 %v275
      %vm557 = vweird.f32 %v550
      %vm558 = vmor %vm556, %vm557
      %v559 = vsel %vm558, %v550, %v555
      %v560 = vrsqrt.pop %v276
      %v561 = vmul.f32 %v560, %v276
      %v562 = vmul.f32 %v561, %v560
      %v563 = vmul.f32 0.5, %v562
      %v564 = vsub.f32 1.5, %v563
      %v565 = vmul.f32 %v560, %v564
      %vm566 = vweird.f32 %v276
      %vm567 = vweird.f32 %v560
      %vm568 = vmor %vm566, %vm567
      %v569 = vsel %vm568, %v560, %v565
      %v570 = vrsqrt.pop %v277
      %v571 = vmul.f32 %v570, %v277
      %v572 = vmul.f32 %v571, %v570
      %v573 = vmul.f32 0.5, %v572
      %v574 = vsub.f32 1.5, %v573
      %v575 = vmul.f32 %v570, %v574
      %vm576 = vweird.f32 %v277
      %vm577 = vweird.f32 %v570
      %vm578 = vmor %vm576, %vm577
      %v579 = vsel %vm578, %v570, %v575
      %v580 = vrsqrt.pop %v278
      %v581 = vmul.f32 %v580, %v278
      %v582 = vmul.f32 %v581, %v580
      %v583 = vmul.f32 0.5, %v582
      %v584 = vsub.f32 1.5, %v583
      %v585 = vmul.f32 %v580, %v584
      %vm586 = vweird.f32 %v278
      %vm587 = vweird.f32 %v580
      %vm588 = vmor %vm586, %vm587
      %v589 = vsel %vm588, %v580, %v585
      %v590 = vrsqrt.pop %v279
      %v591 = vmul.f32 %v590, %v279
      %v592 = vmul.f32 %v591, %v590
      %v593 = vmul.f32 0.5, %v592
      %v594 = vsub.f32 1.5, %v593
      %v595 = vmul.f32 %v590, %v594
      %vm596 = vweird.f32 %v279
      %vm597 = vweird.f32 %v590
      %vm598 = vmor %vm596, %vm597
      %v599 = vsel %vm598, %v590, %v595
      %v600 = vmul.f32 %v120, %v289
      %v601 = vmul.f32 %v121, %v299
      %v602 = vmul.f32 %v122, %v309
      %v603 = vmul.f32 %v123, %v319
      %v604 = vmul.f32 %v124, %v329
      %v605 = vmul.f32 %v125, %v339
      %v606 = vmul.f32 %v126, %v349
      %v607 = vmul.f32 %v127, %v359
      %v608 = vmul.f32 %v128, %v369
      %v609 = vmul.f32 %v129, %v379
      %v610 = vmul.f32 %v130, %v389
      %v611 = vmul.f32 %v131, %v399
      %v612 = vmul.f32 %v132, %v409
      %v613 = vmul.f32 %v133, %v419
      %v614 = vmul.f32 %v134, %v429
      %v615 = vmul.f32 %v135, %v439
      %v616 = vmul.f32 %v136, %v449
      %v617 = vmul.f32 %v137, %v459
      %v618 = vmul.f32 %v138, %v469
      %v619 = vmul.f32 %v139, %v479
      %v620 = vmul.f32 %v140, %v489
      %v621 = vmul.f32 %v141, %v499
      %v622 = vmul.f32 %v142, %v509
      %v623 = vmul.f32 %v143, %v519
      %v624 = vmul.f32 %v144, %v529
      %v625 = vmul.f32 %v145, %v539
      %v626 = vmul.f32 %v146, %v549
      %v627 = vmul.f32 %v147, %v559
      %v628 = vmul.f32 %v148, %v569
      %v629 = vmul.f32 %v149, %v579
      %v630 = vmul.f32 %v150, %v589
      %v631 = vmul.f32 %v151, %v599
      %632 = vst [vmem:[%s118] sm:$0xff] %v600
      %633 = vst [vmem:[%s118 + $0x8] sm:$0xff] %v601
      %634 = vst [vmem:[%s118 + $0x10] sm:$0xff] %v602
      %635 = vst [vmem:[%s118 + $0x18] sm:$0xff] %v603
      %636 = vst [vmem:[%s118 + $0x20] sm:$0xff] %v604
      %637 = vst [vmem:[%s118 + $0x28] sm:$0xff] %v605
      %638 = vst [vmem:[%s118 + $0x30] sm:$0xff] %v606
      %639 = vst [vmem:[%s118 + $0x38] sm:$0xff] %v607
      %640 = vst [vmem:[%s118 + $0x40] sm:$0xff] %v608
      %641 = vst [vmem:[%s118 + $0x48] sm:$0xff] %v609
      %642 = vst [vmem:[%s118 + $0x50] sm:$0xff] %v610
      %643 = vst [vmem:[%s118 + $0x58] sm:$0xff] %v611
      %644 = vst [vmem:[%s118 + $0x60] sm:$0xff] %v612
      %645 = vst [vmem:[%s118 + $0x68] sm:$0xff] %v613
      %646 = vst [vmem:[%s118 + $0x70] sm:$0xff] %v614
      %647 = vst [vmem:[%s118 + $0x78] sm:$0xff] %v615
      %648 = vst [vmem:[%s118 + $0x80] sm:$0xff] %v616
      %649 = vst [vmem:[%s118 + $0x88] sm:$0xff] %v617
      %650 = vst [vmem:[%s118 + $0x90] sm:$0xff] %v618
      %651 = vst [vmem:[%s118 + $0x98] sm:$0xff] %v619
      %652 = vst [vmem:[%s118 + $0xa0] sm:$0xff] %v620
      %653 = vst [vmem:[%s118 + $0xa8] sm:$0xff] %v621
      %654 = vst [vmem:[%s118 + $0xb0] sm:$0xff] %v622
      %655 = vst [vmem:[%s118 + $0xb8] sm:$0xff] %v623
      %656 = vst [vmem:[%s118 + $0xc0] sm:$0xff] %v624
      %657 = vst [vmem:[%s118 + $0xc8] sm:$0xff] %v625
      %658 = vst [vmem:[%s118 + $0xd0] sm:$0xff] %v626
      %659 = vst [vmem:[%s118 + $0xd8] sm:$0xff] %v627
      %660 = vst [vmem:[%s118 + $0xe0] sm:$0xff] %v628
      %661 = vst [vmem:[%s118 + $0xe8] sm:$0xff] %v629
      %662 = vst [vmem:[%s118 + $0xf0] sm:$0xff] %v630
      %663 = vst [vmem:[%s118 + $0xf8] sm:$0xff] %v631
      %s664 = smul.u32 32, %s12
      %p665 = scmp.lt.s32.totalorder %s664, 63
      %s666 = scalar_select %p665, %s664, 63
      %s667 = smul.addr %s666, 8
      %s668 = scalar_lea.vmem %s1, %s667
      // Predicated region
      $region25: #{_sift_device.4} parent=23 // pred_check
        %p669 = pneg %p56
      $region26: #{_sift_device.4} parent=23 // pred_check_branch
        %671 = sbr.rel (%p669) target = $region28
      $region27: #{_sift_device.4} parent=23 // pred_region
        %s672 = smul.u32 32, %s12
      $region28: #{_sift_device.4} parent=23 // pred_fallthru
        _
    $region24: #{_sift_device.4} parent=5 // pred_fallthru
      _
    %p673 = scmp.le.s32.totalorder 2, %s7
    // Predicated region
    $region29: #{_sift_device.4} parent=5 // pred_check
      %p674 = pneg %p673
    $region30: #{_sift_device.4} parent=5 // pred_check_branch
      %676 = sbr.rel (%p674) target = $region32
    $region31: #{_sift_device.4} parent=5 // pred_region
      %s677 = ssub.s32 %s7, 2
      // Predicated region
      $region33: #{_sift_device.4} parent=31 // pred_check
        %p678 = pneg %p62
      $region34: #{_sift_device.4} parent=31 // pred_check_branch
        %680 = sbr.rel (%p678) target = $region36
      $region35: #{_sift_device.4} parent=31 // pred_region
        %s681 = smul.u32 32, %s13
        %p682 = scmp.lt.s32.totalorder %s681, 63
        %s683 = scalar_select %p682, %s681, 63
        %s684 = smul.addr %s683, 8
        %s685 = scalar_lea.vmem %s1, %s684
      $region36: #{_sift_device.4} parent=31 // pred_fallthru
        _
    $region32: #{_sift_device.4} parent=5 // pred_fallthru
      _
  $region6: #{_sift_device.4} parent=0 // loop_footer
    %s11 = sadd.s32 1, %s7
  $region7: #{_sift_device.4} parent=0 // loop_footer_branch
    %6 = sbr.rel target = $region3
  $region8: #{_sift_device.4} parent=0 // loop_exit
    _

// kernel: _sift_device.5
$region0: #{_sift_device.5}
  #allocation0 [shape = 'u32[]', space=smem, size = 0x4, offset = 0x4, fixed_abs, tag = 'smem constant byte address 0x4 - core index']
  #allocation1 [shape = 'u32[72,128]{1,0:T(1,128)}', space=vmem, size = 0x9000, scoped, tag = 'internal scratch']
  %s0 = inlined_call_operand.vmem [shape: f32[512,128], index: 0, kind: input, shape index: {}]
  %s1 = inlined_call_operand.vmem [shape: f32[512,128], index: 1, kind: input, shape index: {}]
  %s2 = inlined_call_operand.vmem [shape: s32[512,1], index: 2, kind: output, shape index: {0}]
  %s3 = inlined_call_operand.vmem [shape: f32[512,1], index: 3, kind: output, shape index: {1}]
  %s4 = inlined_call_operand.vmem [shape: f32[2,1,512], index: 4, kind: output, shape index: {2}]
  %s5 = inlined_call_operand.vmem [shape: s32[2,1,512], index: 5, kind: output, shape index: {3}]
  %6 = xla_tuple %s2, %s3, %s4, %s5
  %s7 = sld [smem:[#allocation0]]
  $region69: #{_sift_device.5} parent=0
    _
  %s9 = ssub.s32 1, %s7
  %s10 = scalar_select 0, %s9, %s7
  loop: start=0, step=1, limit=6
  $region2: #{_sift_device.5} parent=0 // loop_pre_header
    _
  $region3: #{_sift_device.5} parent=0 // loop_header
    %s12 = sphi 0, %s16
    %p13 = scmp.ge.s32.totalorder %s12, 6
    %s19 = sphi 0, %s31
    %s20 = sphi 0, %s27
    %s21 = sphi 0, %s19
    %s22 = sphi 0, %s20
    %s23 = sphi 0, %s21
    %s24 = sphi 0, %s22
    %s34 = sphi 0, %s36
    %s37 = sphi 0, %s34
    %s38 = sphi 0, %s37
    %s54 = sphi 0, %s38
    %s60 = sphi 0, %s62
    %s63 = sphi 0, %s60
    %s64 = sphi 0, %s63
    %s80 = sphi 0, %s64
    %s86 = sphi 0, %s88
    %s89 = sphi 0, %s86
    %s90 = sphi 0, %s89
    %s106 = sphi 0, %s90
    %s112 = sphi 0, %s114
    %s115 = sphi 0, %s112
    %s116 = sphi 0, %s115
    %s132 = sphi 0, %s116
    %s140 = sphi 0, %s142
    %s143 = sphi 0, %s140
    %s144 = sphi 0, %s143
    %s160 = sphi 0, %s144
    %s168 = sphi 0, %s170
    %s171 = sphi 0, %s168
    %s172 = sphi 0, %s171
    %s188 = sphi 0, %s172
  $region4: #{_sift_device.5} parent=0 // loop_header_branch
    %15 = sbr.rel (%p13) target = $region8
  $region5: #{_sift_device.5} parent=0 // loop_body
    %s17 = ssub.s32 %s12, 1
    %s18 = ssub.s32 %s12, 2
    %s25 = sadd.s32 1, %s20
    %p26 = scmp.ge.s32.totalorder %s25, 2
    %s27 = scalar_select %p26, 0, %s25
    %s28 = sadd.s32 1, %s19
    %s29 = scalar_select %p26, %s28, %s19
    %p30 = scmp.ge.s32.totalorder %s29, 2
    %s31 = scalar_select %p30, 0, %s29
    %s32 = ssub.s32 %s19, %s31
    %p33 = scmp.eq.s32.totalorder %s32, 0
    %s35 = sadd.s32 %s34, 1
    %s36 = scalar_select %p33, %s34, %s35
    %p39 = pneg %p33
    %p40 = scmp.eq.s32.totalorder %s12, 3
    %p41 = por %p39, %p40
    %p42 = scmp.ne.s32.totalorder %s34, %s37
    %p43 = scmp.eq.s32.totalorder %s12, 0
    %p44 = por %p42, %p43
    %p45 = scmp.ne.s32.totalorder %s34, %s37
    %p46 = scmp.eq.s32.totalorder %s17, 3
    %p47 = por %p45, %p46
    %p48 = scmp.ne.s32.totalorder %s37, %s38
    %p49 = scmp.eq.s32.totalorder %s17, 0
    %p50 = por %p48, %p49
    %p51 = scmp.ne.s32.totalorder %s37, %s38
    %p52 = scmp.eq.s32.totalorder %s18, 3
    %p53 = por %p51, %p52
    %p55 = scmp.ne.s32.totalorder %s38, %s54
    %p56 = scmp.eq.s32.totalorder %s18, 0
    %p57 = por %p55, %p56
    %s58 = ssub.s32 %s20, %s27
    %p59 = scmp.eq.s32.totalorder %s58, 0
    %s61 = sadd.s32 %s60, 1
    %s62 = scalar_select %p59, %s60, %s61
    %p65 = pneg %p59
    %p66 = scmp.eq.s32.totalorder %s12, 3
    %p67 = por %p65, %p66
    %p68 = scmp.ne.s32.totalorder %s60, %s63
    %p69 = scmp.eq.s32.totalorder %s12, 0
    %p70 = por %p68, %p69
    %p71 = scmp.ne.s32.totalorder %s60, %s63
    %p72 = scmp.eq.s32.totalorder %s17, 3
    %p73 = por %p71, %p72
    %p74 = scmp.ne.s32.totalorder %s63, %s64
    %p75 = scmp.eq.s32.totalorder %s17, 0
    %p76 = por %p74, %p75
    %p77 = scmp.ne.s32.totalorder %s63, %s64
    %p78 = scmp.eq.s32.totalorder %s18, 3
    %p79 = por %p77, %p78
    %p81 = scmp.ne.s32.totalorder %s64, %s80
    %p82 = scmp.eq.s32.totalorder %s18, 0
    %p83 = por %p81, %p82
    %s84 = ssub.s32 %s19, %s31
    %p85 = scmp.eq.s32.totalorder %s84, 0
    %s87 = sadd.s32 %s86, 1
    %s88 = scalar_select %p85, %s86, %s87
    %p91 = pneg %p85
    %p92 = scmp.eq.s32.totalorder %s12, 3
    %p93 = por %p91, %p92
    %p94 = scmp.ne.s32.totalorder %s86, %s89
    %p95 = scmp.eq.s32.totalorder %s12, 0
    %p96 = por %p94, %p95
    %p97 = scmp.ne.s32.totalorder %s86, %s89
    %p98 = scmp.eq.s32.totalorder %s17, 3
    %p99 = por %p97, %p98
    %p100 = scmp.ne.s32.totalorder %s89, %s90
    %p101 = scmp.eq.s32.totalorder %s17, 0
    %p102 = por %p100, %p101
    %p103 = scmp.ne.s32.totalorder %s89, %s90
    %p104 = scmp.eq.s32.totalorder %s18, 3
    %p105 = por %p103, %p104
    %p107 = scmp.ne.s32.totalorder %s90, %s106
    %p108 = scmp.eq.s32.totalorder %s18, 0
    %p109 = por %p107, %p108
    %s110 = ssub.s32 %s19, %s31
    %p111 = scmp.eq.s32.totalorder %s110, 0
    %s113 = sadd.s32 %s112, 1
    %s114 = scalar_select %p111, %s112, %s113
    %p117 = pneg %p111
    %p118 = scmp.eq.s32.totalorder %s12, 3
    %p119 = por %p117, %p118
    %p120 = scmp.ne.s32.totalorder %s112, %s115
    %p121 = scmp.eq.s32.totalorder %s12, 0
    %p122 = por %p120, %p121
    %p123 = scmp.ne.s32.totalorder %s112, %s115
    %p124 = scmp.eq.s32.totalorder %s17, 3
    %p125 = por %p123, %p124
    %p126 = scmp.ne.s32.totalorder %s115, %s116
    %p127 = scmp.eq.s32.totalorder %s17, 0
    %p128 = por %p126, %p127
    %p129 = scmp.ne.s32.totalorder %s115, %s116
    %p130 = scmp.eq.s32.totalorder %s18, 3
    %p131 = por %p129, %p130
    %p133 = scmp.ne.s32.totalorder %s116, %s132
    %p134 = scmp.eq.s32.totalorder %s18, 0
    %p135 = por %p133, %p134
    %s136 = ssub.s32 %s19, %s31
    %s137 = ssub.s32 %s20, %s27
    %s138 = sor.u32 %s136, %s137
    %p139 = scmp.eq.s32.totalorder %s138, 0
    %s141 = sadd.s32 %s140, 1
    %s142 = scalar_select %p139, %s140, %s141
    %p145 = pneg %p139
    %p146 = scmp.eq.s32.totalorder %s12, 3
    %p147 = por %p145, %p146
    %p148 = scmp.ne.s32.totalorder %s140, %s143
    %p149 = scmp.eq.s32.totalorder %s12, 0
    %p150 = por %p148, %p149
    %p151 = scmp.ne.s32.totalorder %s140, %s143
    %p152 = scmp.eq.s32.totalorder %s17, 3
    %p153 = por %p151, %p152
    %p154 = scmp.ne.s32.totalorder %s143, %s144
    %p155 = scmp.eq.s32.totalorder %s17, 0
    %p156 = por %p154, %p155
    %p157 = scmp.ne.s32.totalorder %s143, %s144
    %p158 = scmp.eq.s32.totalorder %s18, 3
    %p159 = por %p157, %p158
    %p161 = scmp.ne.s32.totalorder %s144, %s160
    %p162 = scmp.eq.s32.totalorder %s18, 0
    %p163 = por %p161, %p162
    %s164 = ssub.s32 %s19, %s31
    %s165 = ssub.s32 %s20, %s27
    %s166 = sor.u32 %s164, %s165
    %p167 = scmp.eq.s32.totalorder %s166, 0
    %s169 = sadd.s32 %s168, 1
    %s170 = scalar_select %p167, %s168, %s169
    %p173 = pneg %p167
    %p174 = scmp.eq.s32.totalorder %s12, 3
    %p175 = por %p173, %p174
    %p176 = scmp.ne.s32.totalorder %s168, %s171
    %p177 = scmp.eq.s32.totalorder %s12, 0
    %p178 = por %p176, %p177
    %p179 = scmp.ne.s32.totalorder %s168, %s171
    %p180 = scmp.eq.s32.totalorder %s17, 3
    %p181 = por %p179, %p180
    %p182 = scmp.ne.s32.totalorder %s171, %s172
    %p183 = scmp.eq.s32.totalorder %s17, 0
    %p184 = por %p182, %p183
    %p185 = scmp.ne.s32.totalorder %s171, %s172
    %p186 = scmp.eq.s32.totalorder %s18, 3
    %p187 = por %p185, %p186
    %p189 = scmp.ne.s32.totalorder %s172, %s188
    %p190 = scmp.eq.s32.totalorder %s18, 0
    %p191 = por %p189, %p190
    %p192 = scmp.le.s32.totalorder 1, %s12
    %p193 = scmp.lt.s32.totalorder %s12, 5
    %p194 = pnand %p192, %p193
    %p195 = pneg %p194
    // Predicated region
    $region9: #{_sift_device.5} parent=5 // pred_check
      _
    $region10: #{_sift_device.5} parent=5 // pred_check_branch
      %197 = sbr.rel (%p194) target = $region12
    $region11: #{_sift_device.5} parent=5 // pred_region
      %s198 = ssub.s32 %s12, 1
    $region12: #{_sift_device.5} parent=5 // pred_fallthru
      _
    %p199 = scmp.lt.s32.totalorder %s12, 4
    // Predicated region
    $region13: #{_sift_device.5} parent=5 // pred_check
      %p200 = pneg %p199
    $region14: #{_sift_device.5} parent=5 // pred_check_branch
      %202 = sbr.rel (%p200) target = $region16
    $region15: #{_sift_device.5} parent=5 // pred_region
      // Predicated region
      $region17: #{_sift_device.5} parent=15 // pred_check
        %p203 = pneg %p44
      $region18: #{_sift_device.5} parent=15 // pred_check_branch
        %205 = sbr.rel (%p203) target = $region20
      $region19: #{_sift_device.5} parent=15 // pred_region
        %s206 = smul.u32 32, %s19
        %p207 = scmp.lt.s32.totalorder %s206, 63
        %s208 = scalar_select %p207, %s206, 63
        %s209 = smul.addr %s208, 8
        %s210 = scalar_lea.vmem %s0, %s209
        %s211 = smul.u32 32, %s19
      $region20: #{_sift_device.5} parent=15 // pred_fallthru
        _
      // Predicated region
      $region21: #{_sift_device.5} parent=15 // pred_check
        %p212 = pneg %p70
      $region22: #{_sift_device.5} parent=15 // pred_check_branch
        %214 = sbr.rel (%p212) target = $region24
      $region23: #{_sift_device.5} parent=15 // pred_region
        %s215 = smul.u32 32, %s20
        %p216 = scmp.lt.s32.totalorder %s215, 63
        %s217 = scalar_select %p216, %s215, 63
        %s218 = smul.addr %s217, 8
        %s219 = scalar_lea.vmem %s1, %s218
        %s220 = smul.u32 32, %s20
      $region24: #{_sift_device.5} parent=15 // pred_fallthru
        _
    $region16: #{_sift_device.5} parent=5 // pred_fallthru
      _
    %p221 = scmp.le.s32.totalorder 1, %s12
    %p222 = scmp.lt.s32.totalorder %s12, 5
    %p223 = pnand %p221, %p222
    %p224 = pneg %p223
    // Predicated region
    $region25: #{_sift_device.5} parent=5 // pred_check
      _
    $region26: #{_sift_device.5} parent=5 // pred_check_branch
      %226 = sbr.rel (%p223) target = $region28
    $region27: #{_sift_device.5} parent=5 // pred_region
      %s227 = ssub.s32 %s12, 1
      %s228 = smul.u32 32, %s21
      %p229 = scmp.lt.s32.totalorder %s228, 63
      %s230 = scalar_select %p229, %s228, 63
      %s231 = smul.addr %s230, 8
      %s232 = scalar_lea.vmem %s0, %s231
      %p233 = pneg %p50
      %p234 = pneg %p47
      %s235 = smul.u32 32, %s22
      %p236 = scmp.lt.s32.totalorder %s235, 63
      %s237 = scalar_select %p236, %s235, 63
      %s238 = smul.addr %s237, 8
      %s239 = scalar_lea.vmem %s1, %s238
      %p240 = pneg %p76
      %p241 = pneg %p73
      %p242 = pneg %p102
      %p243 = pneg %p99
      %s244 = smul.u32 32, %s21
      %p245 = scmp.lt.s32.totalorder %s244, 63
      %s246 = scalar_select %p245, %s244, 63
      %s247 = smul.addr %s246, 8
      %s248 = scalar_lea.vmem %s2, %s247
      %p249 = pneg %p128
      %p250 = pneg %p125
      %s251 = smul.u32 32, %s21
      %p252 = scmp.lt.s32.totalorder %s251, 63
      %s253 = scalar_select %p252, %s251, 63
      %s254 = smul.addr %s253, 8
      %s255 = scalar_lea.vmem %s3, %s254
      %p256 = pneg %p156
      %p257 = pneg %p153
      %s258 = smul.u32 2, %s22
      %p259 = scmp.lt.s32.totalorder %s21, 1
      %s260 = scalar_select %p259, %s21, 1
      %p261 = scmp.lt.s32.totalorder %s258, 3
      %s262 = scalar_select %p261, %s258, 3
      %s263 = smul.addr %s260, 4
      %s264 = sadd.s32 %s262, %s263
      %s265 = scalar_lea.vmem %s4, %s264
      %p266 = pneg %p184
      %p267 = pneg %p181
      %s268 = smul.u32 2, %s22
      %p269 = scmp.lt.s32.totalorder %s21, 1
      %s270 = scalar_select %p269, %s21, 1
      %p271 = scmp.lt.s32.totalorder %s268, 3
      %s272 = scalar_select %p271, %s268, 3
      %s273 = smul.addr %s270, 4
      %s274 = sadd.s32 %s272, %s273
      %s275 = scalar_lea.vmem %s5, %s274
      %s276 = smul.u32 32, %s21
      %p277 = scmp.lt.s32.totalorder %s276, 63
      %s278 = scalar_select %p277, %s276, 63
      %s279 = smul.addr %s278, 8
      %s280 = scalar_lea.vmem %s0, %s279
      %s281 = smul.u32 32, %s21
      %s282 = smul.u32 32, %s22
      %p283 = scmp.lt.s32.totalorder %s282, 63
      %s284 = scalar_select %p283, %s282, 63
      %s285 = smul.addr %s284, 8
      %s286 = scalar_lea.vmem %s1, %s285
      %s287 = smul.u32 32, %s22
      %s288 = smul.u32 32, %s21
      %p289 = scmp.lt.s32.totalorder %s288, 63
      %s290 = scalar_select %p289, %s288, 63
      %s291 = smul.addr %s290, 8
      %s292 = scalar_lea.vmem %s2, %s291
      %s293 = smul.u32 32, %s21
      %s294 = smul.u32 32, %s21
      %p295 = scmp.lt.s32.totalorder %s294, 63
      %s296 = scalar_select %p295, %s294, 63
      %s297 = smul.addr %s296, 8
      %s298 = scalar_lea.vmem %s3, %s297
      %s299 = smul.u32 32, %s21
      %s300 = smul.u32 2, %s22
      %p301 = scmp.lt.s32.totalorder %s21, 1
      %s302 = scalar_select %p301, %s21, 1
      %p303 = scmp.lt.s32.totalorder %s300, 3
      %s304 = scalar_select %p303, %s300, 3
      %s305 = smul.addr %s302, 4
      %s306 = sadd.s32 %s304, %s305
      %s307 = scalar_lea.vmem %s4, %s306
      %s308 = smul.u32 2, %s22
      %s309 = smul.u32 2, %s22
      %p310 = scmp.lt.s32.totalorder %s21, 1
      %s311 = scalar_select %p310, %s21, 1
      %p312 = scmp.lt.s32.totalorder %s309, 3
      %s313 = scalar_select %p312, %s309, 3
      %s314 = smul.addr %s311, 4
      %s315 = sadd.s32 %s313, %s314
      %s316 = scalar_lea.vmem %s5, %s315
      %s317 = smul.u32 2, %s22
      %p318 = scmp.eq.s32.totalorder %s22, 0
      // Predicated region
      $region29: #{_sift_device.5} parent=27 // pred_check
        %p319 = pneg %p318
      $region30: #{_sift_device.5} parent=27 // pred_check_branch
        %321 = sbr.rel (%p319) target = $region32
      $region31: #{_sift_device.5} parent=27 // pred_region
        %vm322 = vcmask 7168
        %323 = vst.msk [vmem:[%s298] sm:$0xff] %vm322, -inf
        %324 = vst.msk [vmem:[%s298 + $0x8] sm:$0xff] %vm322, -inf
        %325 = vst.msk [vmem:[%s298 + $0x10] sm:$0xff] %vm322, -inf
        %326 = vst.msk [vmem:[%s298 + $0x18] sm:$0xff] %vm322, -inf
        %327 = vst.msk [vmem:[%s298 + $0x20] sm:$0xff] %vm322, -inf
        %328 = vst.msk [vmem:[%s298 + $0x28] sm:$0xff] %vm322, -inf
        %329 = vst.msk [vmem:[%s298 + $0x30] sm:$0xff] %vm322, -inf
        %330 = vst.msk [vmem:[%s298 + $0x38] sm:$0xff] %vm322, -inf
        %331 = vst.msk [vmem:[%s298 + $0x40] sm:$0xff] %vm322, -inf
        %332 = vst.msk [vmem:[%s298 + $0x48] sm:$0xff] %vm322, -inf
        %333 = vst.msk [vmem:[%s298 + $0x50] sm:$0xff] %vm322, -inf
        %334 = vst.msk [vmem:[%s298 + $0x58] sm:$0xff] %vm322, -inf
        %335 = vst.msk [vmem:[%s298 + $0x60] sm:$0xff] %vm322, -inf
        %336 = vst.msk [vmem:[%s298 + $0x68] sm:$0xff] %vm322, -inf
        %337 = vst.msk [vmem:[%s298 + $0x70] sm:$0xff] %vm322, -inf
        %338 = vst.msk [vmem:[%s298 + $0x78] sm:$0xff] %vm322, -inf
        %339 = vst.msk [vmem:[%s298 + $0x80] sm:$0xff] %vm322, -inf
        %340 = vst.msk [vmem:[%s298 + $0x88] sm:$0xff] %vm322, -inf
        %341 = vst.msk [vmem:[%s298 + $0x90] sm:$0xff] %vm322, -inf
        %342 = vst.msk [vmem:[%s298 + $0x98] sm:$0xff] %vm322, -inf
        %343 = vst.msk [vmem:[%s298 + $0xa0] sm:$0xff] %vm322, -inf
        %344 = vst.msk [vmem:[%s298 + $0xa8] sm:$0xff] %vm322, -inf
        %345 = vst.msk [vmem:[%s298 + $0xb0] sm:$0xff] %vm322, -inf
        %346 = vst.msk [vmem:[%s298 + $0xb8] sm:$0xff] %vm322, -inf
        %347 = vst.msk [vmem:[%s298 + $0xc0] sm:$0xff] %vm322, -inf
        %348 = vst.msk [vmem:[%s298 + $0xc8] sm:$0xff] %vm322, -inf
        %349 = vst.msk [vmem:[%s298 + $0xd0] sm:$0xff] %vm322, -inf
        %350 = vst.msk [vmem:[%s298 + $0xd8] sm:$0xff] %vm322, -inf
        %351 = vst.msk [vmem:[%s298 + $0xe0] sm:$0xff] %vm322, -inf
        %352 = vst.msk [vmem:[%s298 + $0xe8] sm:$0xff] %vm322, -inf
        %353 = vst.msk [vmem:[%s298 + $0xf0] sm:$0xff] %vm322, -inf
        %354 = vst.msk [vmem:[%s298 + $0xf8] sm:$0xff] %vm322, -inf
        %355 = vst.msk [vmem:[%s292] sm:$0xff] %vm322, 0
        %356 = vst.msk [vmem:[%s292 + $0x8] sm:$0xff] %vm322, 0
        %357 = vst.msk [vmem:[%s292 + $0x10] sm:$0xff] %vm322, 0
        %358 = vst.msk [vmem:[%s292 + $0x18] sm:$0xff] %vm322, 0
        %359 = vst.msk [vmem:[%s292 + $0x20] sm:$0xff] %vm322, 0
        %360 = vst.msk [vmem:[%s292 + $0x28] sm:$0xff] %vm322, 0
        %361 = vst.msk [vmem:[%s292 + $0x30] sm:$0xff] %vm322, 0
        %362 = vst.msk [vmem:[%s292 + $0x38] sm:$0xff] %vm322, 0
        %363 = vst.msk [vmem:[%s292 + $0x40] sm:$0xff] %vm322, 0
        %364 = vst.msk [vmem:[%s292 + $0x48] sm:$0xff] %vm322, 0
        %365 = vst.msk [vmem:[%s292 + $0x50] sm:$0xff] %vm322, 0
        %366 = vst.msk [vmem:[%s292 + $0x58] sm:$0xff] %vm322, 0
        %367 = vst.msk [vmem:[%s292 + $0x60] sm:$0xff] %vm322, 0
        %368 = vst.msk [vmem:[%s292 + $0x68] sm:$0xff] %vm322, 0
        %369 = vst.msk [vmem:[%s292 + $0x70] sm:$0xff] %vm322, 0
        %370 = vst.msk [vmem:[%s292 + $0x78] sm:$0xff] %vm322, 0
        %371 = vst.msk [vmem:[%s292 + $0x80] sm:$0xff] %vm322, 0
        %372 = vst.msk [vmem:[%s292 + $0x88] sm:$0xff] %vm322, 0
        %373 = vst.msk [vmem:[%s292 + $0x90] sm:$0xff] %vm322, 0
        %374 = vst.msk [vmem:[%s292 + $0x98] sm:$0xff] %vm322, 0
        %375 = vst.msk [vmem:[%s292 + $0xa0] sm:$0xff] %vm322, 0
        %376 = vst.msk [vmem:[%s292 + $0xa8] sm:$0xff] %vm322, 0
        %377 = vst.msk [vmem:[%s292 + $0xb0] sm:$0xff] %vm322, 0
        %378 = vst.msk [vmem:[%s292 + $0xb8] sm:$0xff] %vm322, 0
        %379 = vst.msk [vmem:[%s292 + $0xc0] sm:$0xff] %vm322, 0
        %380 = vst.msk [vmem:[%s292 + $0xc8] sm:$0xff] %vm322, 0
        %381 = vst.msk [vmem:[%s292 + $0xd0] sm:$0xff] %vm322, 0
        %382 = vst.msk [vmem:[%s292 + $0xd8] sm:$0xff] %vm322, 0
        %383 = vst.msk [vmem:[%s292 + $0xe0] sm:$0xff] %vm322, 0
        %384 = vst.msk [vmem:[%s292 + $0xe8] sm:$0xff] %vm322, 0
        %385 = vst.msk [vmem:[%s292 + $0xf0] sm:$0xff] %vm322, 0
        %386 = vst.msk [vmem:[%s292 + $0xf8] sm:$0xff] %vm322, 0
      $region32: #{_sift_device.5} parent=27 // pred_fallthru
        _
      %v387 = vld [vmem:[%s280] sm:$0xff]
      %v388 = vld [vmem:[%s280 + $0x8] sm:$0xff]
      %v389 = vld [vmem:[%s280 + $0x10] sm:$0xff]
      %v390 = vld [vmem:[%s280 + $0x18] sm:$0xff]
      %v391 = vld [vmem:[%s280 + $0x20] sm:$0xff]
      %v392 = vld [vmem:[%s280 + $0x28] sm:$0xff]
      %v393 = vld [vmem:[%s280 + $0x30] sm:$0xff]
      %v394 = vld [vmem:[%s280 + $0x38] sm:$0xff]
      %v395 = vld [vmem:[%s280 + $0x40] sm:$0xff]
      %v396 = vld [vmem:[%s280 + $0x48] sm:$0xff]
      %v397 = vld [vmem:[%s280 + $0x50] sm:$0xff]
      %v398 = vld [vmem:[%s280 + $0x58] sm:$0xff]
      %v399 = vld [vmem:[%s280 + $0x60] sm:$0xff]
      %v400 = vld [vmem:[%s280 + $0x68] sm:$0xff]
      %v401 = vld [vmem:[%s280 + $0x70] sm:$0xff]
      %v402 = vld [vmem:[%s280 + $0x78] sm:$0xff]
      %v403 = vld [vmem:[%s280 + $0x80] sm:$0xff]
      %v404 = vld [vmem:[%s280 + $0x88] sm:$0xff]
      %v405 = vld [vmem:[%s280 + $0x90] sm:$0xff]
      %v406 = vld [vmem:[%s280 + $0x98] sm:$0xff]
      %v407 = vld [vmem:[%s280 + $0xa0] sm:$0xff]
      %v408 = vld [vmem:[%s280 + $0xa8] sm:$0xff]
      %v409 = vld [vmem:[%s280 + $0xb0] sm:$0xff]
      %v410 = vld [vmem:[%s280 + $0xb8] sm:$0xff]
      %v411 = vld [vmem:[%s280 + $0xc0] sm:$0xff]
      %v412 = vld [vmem:[%s280 + $0xc8] sm:$0xff]
      %v413 = vld [vmem:[%s280 + $0xd0] sm:$0xff]
      %v414 = vld [vmem:[%s280 + $0xd8] sm:$0xff]
      %v415 = vld [vmem:[%s280 + $0xe0] sm:$0xff]
      %v416 = vld [vmem:[%s280 + $0xe8] sm:$0xff]
      %v417 = vld [vmem:[%s280 + $0xf0] sm:$0xff]
      %v418 = vld [vmem:[%s280 + $0xf8] sm:$0xff]
      %v419 = vld [vmem:[%s286] sm:$0xff]
      %v420 = vld [vmem:[%s286 + $0x8] sm:$0xff]
      %v421 = vld [vmem:[%s286 + $0x10] sm:$0xff]
      %v422 = vld [vmem:[%s286 + $0x18] sm:$0xff]
      %v423 = vld [vmem:[%s286 + $0x20] sm:$0xff]
      %v424 = vld [vmem:[%s286 + $0x28] sm:$0xff]
      %v425 = vld [vmem:[%s286 + $0x30] sm:$0xff]
      %v426 = vld [vmem:[%s286 + $0x38] sm:$0xff]
      %v427 = vld [vmem:[%s286 + $0x40] sm:$0xff]
      %v428 = vld [vmem:[%s286 + $0x48] sm:$0xff]
      %v429 = vld [vmem:[%s286 + $0x50] sm:$0xff]
      %v430 = vld [vmem:[%s286 + $0x58] sm:$0xff]
      %v431 = vld [vmem:[%s286 + $0x60] sm:$0xff]
      %v432 = vld [vmem:[%s286 + $0x68] sm:$0xff]
      %v433 = vld [vmem:[%s286 + $0x70] sm:$0xff]
      %v434 = vld [vmem:[%s286 + $0x78] sm:$0xff]
      %v435 = vld [vmem:[%s286 + $0x80] sm:$0xff]
      %v436 = vld [vmem:[%s286 + $0x88] sm:$0xff]
      %v437 = vld [vmem:[%s286 + $0x90] sm:$0xff]
      %v438 = vld [vmem:[%s286 + $0x98] sm:$0xff]
      %v439 = vld [vmem:[%s286 + $0xa0] sm:$0xff]
      %v440 = vld [vmem:[%s286 + $0xa8] sm:$0xff]
      %v441 = vld [vmem:[%s286 + $0xb0] sm:$0xff]
      %v442 = vld [vmem:[%s286 + $0xb8] sm:$0xff]
      %v443 = vld [vmem:[%s286 + $0xc0] sm:$0xff]
      %v444 = vld [vmem:[%s286 + $0xc8] sm:$0xff]
      %v445 = vld [vmem:[%s286 + $0xd0] sm:$0xff]
      %v446 = vld [vmem:[%s286 + $0xd8] sm:$0xff]
      %v447 = vld [vmem:[%s286 + $0xe0] sm:$0xff]
      %v448 = vld [vmem:[%s286 + $0xe8] sm:$0xff]
      %v449 = vld [vmem:[%s286 + $0xf0] sm:$0xff]
      %v450 = vld [vmem:[%s286 + $0xf8] sm:$0xff]
      %451 = vmatpush.xpose.msra.mxu0 %v434
      %452 = vmatpush.xpose.msra.mxu0 %v433
      %453 = vmatpush.xpose.msra.mxu0 %v432
      %454 = vmatpush.xpose.msra.mxu0 %v431
      %455 = vmatpush.xpose.msra.mxu0 %v430
      %456 = vmatpush.xpose.msra.mxu0 %v429
      %457 = vmatpush.xpose.msra.mxu0 %v428
      %458 = vmatpush.xpose.msra.mxu0 %v427
      %459 = vmatpush.xpose.msra.mxu0 %v426
      %460 = vmatpush.xpose.msra.mxu0 %v425
      %461 = vmatpush.xpose.msra.mxu0 %v424
      %462 = vmatpush.xpose.msra.mxu0 %v423
      %463 = vmatpush.xpose.msra.mxu0 %v422
      %464 = vmatpush.xpose.msra.mxu0 %v421
      %465 = vmatpush.xpose.msra.mxu0 %v420
      %466 = vmatpush.xpose.msra.mxu0 %v419
      %467 = vmatmul.f32.gmra.mxu0 %v387
      %v468 = vpop.f32.mrf.mxu0
      %v469 = vadd.f32 0.0, %v468
      %470 = vmatmul.f32.gmra.mxu0 %v388
      %v471 = vpop.f32.mrf.mxu0
      %v472 = vadd.f32 0.0, %v471
      %473 = vmatmul.f32.gmra.mxu0 %v389
      %v474 = vpop.f32.mrf.mxu0
      %v475 = vadd.f32 0.0, %v474
      %476 = vmatmul.f32.gmra.mxu0 %v390
      %v477 = vpop.f32.mrf.mxu0
      %v478 = vadd.f32 0.0, %v477
      %479 = vmatmul.f32.gmra.mxu0 %v391
      %v480 = vpop.f32.mrf.mxu0
      %v481 = vadd.f32 0.0, %v480
      %482 = vmatmul.f32.gmra.mxu0 %v392
      %v483 = vpop.f32.mrf.mxu0
      %v484 = vadd.f32 0.0, %v483
      %485 = vmatmul.f32.gmra.mxu0 %v393
      %v486 = vpop.f32.mrf.mxu0
      %v487 = vadd.f32 0.0, %v486
      %488 = vmatmul.f32.gmra.mxu0 %v394
      %v489 = vpop.f32.mrf.mxu0
      %v490 = vadd.f32 0.0, %v489
      %491 = vmatmul.f32.gmra.mxu0 %v395
      %v492 = vpop.f32.mrf.mxu0
      %v493 = vadd.f32 0.0, %v492
      %494 = vmatmul.f32.gmra.mxu0 %v396
      %v495 = vpop.f32.mrf.mxu0
      %v496 = vadd.f32 0.0, %v495
      %497 = vmatmul.f32.gmra.mxu0 %v397
      %v498 = vpop.f32.mrf.mxu0
      %v499 = vadd.f32 0.0, %v498
      %500 = vmatmul.f32.gmra.mxu0 %v398
      %v501 = vpop.f32.mrf.mxu0
      %v502 = vadd.f32 0.0, %v501
      %503 = vmatmul.f32.gmra.mxu0 %v399
      %v504 = vpop.f32.mrf.mxu0
      %v505 = vadd.f32 0.0, %v504
      %506 = vmatmul.f32.gmra.mxu0 %v400
      %v507 = vpop.f32.mrf.mxu0
      %v508 = vadd.f32 0.0, %v507
      %509 = vmatmul.f32.gmra.mxu0 %v401
      %v510 = vpop.f32.mrf.mxu0
      %v511 = vadd.f32 0.0, %v510
      %512 = vmatmul.f32.gmra.mxu0 %v402
      %v513 = vpop.f32.mrf.mxu0
      %v514 = vadd.f32 0.0, %v513
      %515 = vmatmul.f32.gmra.mxu0 %v403
      %v516 = vpop.f32.mrf.mxu0
      %v517 = vadd.f32 0.0, %v516
      %518 = vmatmul.f32.gmra.mxu0 %v404
      %v519 = vpop.f32.mrf.mxu0
      %v520 = vadd.f32 0.0, %v519
      %521 = vmatmul.f32.gmra.mxu0 %v405
      %v522 = vpop.f32.mrf.mxu0
      %v523 = vadd.f32 0.0, %v522
      %524 = vmatmul.f32.gmra.mxu0 %v406
      %v525 = vpop.f32.mrf.mxu0
      %v526 = vadd.f32 0.0, %v525
      %527 = vmatmul.f32.gmra.mxu0 %v407
      %v528 = vpop.f32.mrf.mxu0
      %v529 = vadd.f32 0.0, %v528
      %530 = vmatmul.f32.gmra.mxu0 %v408
      %v531 = vpop.f32.mrf.mxu0
      %v532 = vadd.f32 0.0, %v531
      %533 = vmatmul.f32.gmra.mxu0 %v409
      %v534 = vpop.f32.mrf.mxu0
      %v535 = vadd.f32 0.0, %v534
      %536 = vmatmul.f32.gmra.mxu0 %v410
      %v537 = vpop.f32.mrf.mxu0
      %v538 = vadd.f32 0.0, %v537
      %539 = vmatmul.f32.gmra.mxu0 %v411
      %v540 = vpop.f32.mrf.mxu0
      %v541 = vadd.f32 0.0, %v540
      %542 = vmatmul.f32.gmra.mxu0 %v412
      %v543 = vpop.f32.mrf.mxu0
      %v544 = vadd.f32 0.0, %v543
      %545 = vmatmul.f32.gmra.mxu0 %v413
      %v546 = vpop.f32.mrf.mxu0
      %v547 = vadd.f32 0.0, %v546
      %548 = vmatmul.f32.gmra.mxu0 %v414
      %v549 = vpop.f32.mrf.mxu0
      %v550 = vadd.f32 0.0, %v549
      %551 = vmatmul.f32.gmra.mxu0 %v415
      %v552 = vpop.f32.mrf.mxu0
      %v553 = vadd.f32 0.0, %v552
      %554 = vmatmul.f32.gmra.mxu0 %v416
      %v555 = vpop.f32.mrf.mxu0
      %v556 = vadd.f32 0.0, %v555
      %557 = vmatmul.f32.gmra.mxu0 %v417
      %v558 = vpop.f32.mrf.mxu0
      %v559 = vadd.f32 0.0, %v558
      %560 = vmatmul.f32.gmra.mxu0 %v418
      %v561 = vpop.f32.mrf.mxu0
      %v562 = vadd.f32 0.0, %v561
      %563 = vdwg.mxu0
      %564 = vmatpush.xpose.msra.mxu0 %v450
      %565 = vmatpush.xpose.msra.mxu0 %v449
      %566 = vmatpush.xpose.msra.mxu0 %v448
      %567 = vmatpush.xpose.msra.mxu0 %v447
      %568 = vmatpush.xpose.msra.mxu0 %v446
      %569 = vmatpush.xpose.msra.mxu0 %v445
      %570 = vmatpush.xpose.msra.mxu0 %v444
      %571 = vmatpush.xpose.msra.mxu0 %v443
      %572 = vmatpush.xpose.msra.mxu0 %v442
      %573 = vmatpush.xpose.msra.mxu0 %v441
      %574 = vmatpush.xpose.msra.mxu0 %v440
      %575 = vmatpush.xpose.msra.mxu0 %v439
      %576 = vmatpush.xpose.msra.mxu0 %v438
      %577 = vmatpush.xpose.msra.mxu0 %v437
      %578 = vmatpush.xpose.msra.mxu0 %v436
      %579 = vmatpush.xpose.msra.mxu0 %v435
      %580 = vmatmul.f32.gmra.mxu0 %v387
      %v581 = vpop.f32.mrf.mxu0
      %v582 = vadd.f32 0.0, %v581
      %583 = vmatmul.f32.gmra.mxu0 %v388
      %v584 = vpop.f32.mrf.mxu0
      %v585 = vadd.f32 0.0, %v584
      %586 = vmatmul.f32.gmra.mxu0 %v389
      %v587 = vpop.f32.mrf.mxu0
      %v588 = vadd.f32 0.0, %v587
      %589 = vmatmul.f32.gmra.mxu0 %v390
      %v590 = vpop.f32.mrf.mxu0
      %v591 = vadd.f32 0.0, %v590
      %592 = vmatmul.f32.gmra.mxu0 %v391
      %v593 = vpop.f32.mrf.mxu0
      %v594 = vadd.f32 0.0, %v593
      %595 = vmatmul.f32.gmra.mxu0 %v392
      %v596 = vpop.f32.mrf.mxu0
      %v597 = vadd.f32 0.0, %v596
      %598 = vmatmul.f32.gmra.mxu0 %v393
      %v599 = vpop.f32.mrf.mxu0
      %v600 = vadd.f32 0.0, %v599
      %601 = vmatmul.f32.gmra.mxu0 %v394
      %v602 = vpop.f32.mrf.mxu0
      %v603 = vadd.f32 0.0, %v602
      %604 = vmatmul.f32.gmra.mxu0 %v395
      %v605 = vpop.f32.mrf.mxu0
      %v606 = vadd.f32 0.0, %v605
      %607 = vmatmul.f32.gmra.mxu0 %v396
      %v608 = vpop.f32.mrf.mxu0
      %v609 = vadd.f32 0.0, %v608
      %610 = vmatmul.f32.gmra.mxu0 %v397
      %v611 = vpop.f32.mrf.mxu0
      %v612 = vadd.f32 0.0, %v611
      %613 = vmatmul.f32.gmra.mxu0 %v398
      %v614 = vpop.f32.mrf.mxu0
      %v615 = vadd.f32 0.0, %v614
      %616 = vmatmul.f32.gmra.mxu0 %v399
      %v617 = vpop.f32.mrf.mxu0
      %v618 = vadd.f32 0.0, %v617
      %619 = vmatmul.f32.gmra.mxu0 %v400
      %v620 = vpop.f32.mrf.mxu0
      %v621 = vadd.f32 0.0, %v620
      %622 = vmatmul.f32.gmra.mxu0 %v401
      %v623 = vpop.f32.mrf.mxu0
      %v624 = vadd.f32 0.0, %v623
      %625 = vmatmul.f32.gmra.mxu0 %v402
      %v626 = vpop.f32.mrf.mxu0
      %v627 = vadd.f32 0.0, %v626
      %628 = vmatmul.f32.gmra.mxu0 %v403
      %v629 = vpop.f32.mrf.mxu0
      %v630 = vadd.f32 0.0, %v629
      %631 = vmatmul.f32.gmra.mxu0 %v404
      %v632 = vpop.f32.mrf.mxu0
      %v633 = vadd.f32 0.0, %v632
      %634 = vmatmul.f32.gmra.mxu0 %v405
      %v635 = vpop.f32.mrf.mxu0
      %v636 = vadd.f32 0.0, %v635
      %637 = vmatmul.f32.gmra.mxu0 %v406
      %v638 = vpop.f32.mrf.mxu0
      %v639 = vadd.f32 0.0, %v638
      %640 = vmatmul.f32.gmra.mxu0 %v407
      %v641 = vpop.f32.mrf.mxu0
      %v642 = vadd.f32 0.0, %v641
      %643 = vmatmul.f32.gmra.mxu0 %v408
      %v644 = vpop.f32.mrf.mxu0
      %v645 = vadd.f32 0.0, %v644
      %646 = vmatmul.f32.gmra.mxu0 %v409
      %v647 = vpop.f32.mrf.mxu0
      %v648 = vadd.f32 0.0, %v647
      %649 = vmatmul.f32.gmra.mxu0 %v410
      %v650 = vpop.f32.mrf.mxu0
      %v651 = vadd.f32 0.0, %v650
      %652 = vmatmul.f32.gmra.mxu0 %v411
      %v653 = vpop.f32.mrf.mxu0
      %v654 = vadd.f32 0.0, %v653
      %655 = vmatmul.f32.gmra.mxu0 %v412
      %v656 = vpop.f32.mrf.mxu0
      %v657 = vadd.f32 0.0, %v656
      %658 = vmatmul.f32.gmra.mxu0 %v413
      %v659 = vpop.f32.mrf.mxu0
      %v660 = vadd.f32 0.0, %v659
      %661 = vmatmul.f32.gmra.mxu0 %v414
      %v662 = vpop.f32.mrf.mxu0
      %v663 = vadd.f32 0.0, %v662
      %664 = vmatmul.f32.gmra.mxu0 %v415
      %v665 = vpop.f32.mrf.mxu0
      %v666 = vadd.f32 0.0, %v665
      %667 = vmatmul.f32.gmra.mxu0 %v416
      %v668 = vpop.f32.mrf.mxu0
      %v669 = vadd.f32 0.0, %v668
      %670 = vmatmul.f32.gmra.mxu0 %v417
      %v671 = vpop.f32.mrf.mxu0
      %v672 = vadd.f32 0.0, %v671
      %673 = vmatmul.f32.gmra.mxu0 %v418
      %v674 = vpop.f32.mrf.mxu0
      %v675 = vadd.f32 0.0, %v674
      %676 = vdwg.mxu0
      %s677 = smul.u32 %s21, 256
      %v678 = vlaneseq
      %v679 = vshrl.u32 %v678, 7
      %v680 = vadd.s32 %v679, 8
      %v681 = vadd.s32 %v679, 16
      %v682 = vadd.s32 %v679, 24
      %v683 = vadd.s32 %v679, 32
      %v684 = vadd.s32 %v679, 40
      %v685 = vadd.s32 %v679, 48
      %v686 = vadd.s32 %v679, 56
      %v687 = vadd.s32 %v679, 64
      %v688 = vadd.s32 %v679, 72
      %v689 = vadd.s32 %v679, 80
      %v690 = vadd.s32 %v679, 88
      %v691 = vadd.s32 %v679, 96
      %v692 = vadd.s32 %v679, 104
      %v693 = vadd.s32 %v679, 112
      %v694 = vadd.s32 %v679, 120
      %v695 = vadd.s32 %v679, 128
      %v696 = vadd.s32 %v679, 136
      %v697 = vadd.s32 %v679, 144
      %v698 = vadd.s32 %v679, 152
      %v699 = vadd.s32 %v679, 160
      %v700 = vadd.s32 %v679, 168
      %v701 = vadd.s32 %v679, 176
      %v702 = vadd.s32 %v679, 184
      %v703 = vadd.s32 %v679, 192
      %v704 = vadd.s32 %v679, 200
      %v705 = vadd.s32 %v679, 208
      %v706 = vadd.s32 %v679, 216
      %v707 = vadd.s32 %v679, 224
      %v708 = vadd.s32 %v679, 232
      %v709 = vadd.s32 %v679, 240
      %v710 = vadd.s32 %v679, 248
      %v711 = vstv %s677
      %v712 = vadd.s32 %v711, %v679
      %v713 = vadd.s32 %v711, %v680
      %v714 = vadd.s32 %v711, %v681
      %v715 = vadd.s32 %v711, %v682
      %v716 = vadd.s32 %v711, %v683
      %v717 = vadd.s32 %v711, %v684
      %v718 = vadd.s32 %v711, %v685
      %v719 = vadd.s32 %v711, %v686
      %v720 = vadd.s32 %v711, %v687
      %v721 = vadd.s32 %v711, %v688
      %v722 = vadd.s32 %v711, %v689
      %v723 = vadd.s32 %v711, %v690
      %v724 = vadd.s32 %v711, %v691
      %v725 = vadd.s32 %v711, %v692
      %v726 = vadd.s32 %v711, %v693
      %v727 = vadd.s32 %v711, %v694
      %v728 = vadd.s32 %v711, %v695
      %v729 = vadd.s32 %v711, %v696
      %v730 = vadd.s32 %v711, %v697
      %v731 = vadd.s32 %v711, %v698
      %v732 = vadd.s32 %v711, %v699
      %v733 = vadd.s32 %v711, %v700
      %v734 = vadd.s32 %v711, %v701
      %v735 = vadd.s32 %v711, %v702
      %v736 = vadd.s32 %v711, %v703
      %v737 = vadd.s32 %v711, %v704
      %v738 = vadd.s32 %v711, %v705
      %v739 = vadd.s32 %v711, %v706
      %v740 = vadd.s32 %v711, %v707
      %v741 = vadd.s32 %v711, %v708
      %v742 = vadd.s32 %v711, %v709
      %v743 = vadd.s32 %v711, %v710
      %s744 = smul.u32 %s22, 256
      %v745 = vlaneseq
      %v746 = vand.u32 %v745, 127
      %v747 = vadd.s32 %v746, 128
      %v748 = vstv %s744
      %v749 = vadd.s32 %v748, %v746
      %v750 = vadd.s32 %v748, %v747
      %vm751 = vcmp.lt.s32.totalorder %v712, 512
      %vm752 = vcmp.lt.s32.totalorder %v713, 512
      %vm753 = vcmp.lt.s32.totalorder %v714, 512
      %vm754 = vcmp.lt.s32.totalorder %v715, 512
      %vm755 = vcmp.lt.s32.totalorder %v716, 512
      %vm756 = vcmp.lt.s32.totalorder %v717, 512
      %vm757 = vcmp.lt.s32.totalorder %v718, 512
      %vm758 = vcmp.lt.s32.totalorder %v719, 512
      %vm759 = vcmp.lt.s32.totalorder %v720, 512
      %vm760 = vcmp.lt.s32.totalorder %v721, 512
      %vm761 = vcmp.lt.s32.totalorder %v722, 512
      %vm762 = vcmp.lt.s32.totalorder %v723, 512
      %vm763 = vcmp.lt.s32.totalorder %v724, 512
      %vm764 = vcmp.lt.s32.totalorder %v725, 512
      %vm765 = vcmp.lt.s32.totalorder %v726, 512
      %vm766 = vcmp.lt.s32.totalorder %v727, 512
      %vm767 = vcmp.lt.s32.totalorder %v728, 512
      %vm768 = vcmp.lt.s32.totalorder %v729, 512
      %vm769 = vcmp.lt.s32.totalorder %v730, 512
      %vm770 = vcmp.lt.s32.totalorder %v731, 512
      %vm771 = vcmp.lt.s32.totalorder %v732, 512
      %vm772 = vcmp.lt.s32.totalorder %v733, 512
      %vm773 = vcmp.lt.s32.totalorder %v734, 512
      %vm774 = vcmp.lt.s32.totalorder %v735, 512
      %vm775 = vcmp.lt.s32.totalorder %v736, 512
      %vm776 = vcmp.lt.s32.totalorder %v737, 512
      %vm777 = vcmp.lt.s32.totalorder %v738, 512
      %vm778 = vcmp.lt.s32.totalorder %v739, 512
      %vm779 = vcmp.lt.s32.totalorder %v740, 512
      %vm780 = vcmp.lt.s32.totalorder %v741, 512
      %vm781 = vcmp.lt.s32.totalorder %v742, 512
      %vm782 = vcmp.lt.s32.totalorder %v743, 512
      %vm783 = vcmp.lt.s32.totalorder %v749, 384
      %vm784 = vcmp.lt.s32.totalorder %v750, 384
      %v785 = vsel %vm751, 1, 0
      %v786 = vsel %vm752, 1, 0
      %v787 = vsel %vm753, 1, 0
      %v788 = vsel %vm754, 1, 0
      %v789 = vsel %vm755, 1, 0
      %v790 = vsel %vm756, 1, 0
      %v791 = vsel %vm757, 1, 0
      %v792 = vsel %vm758, 1, 0
      %v793 = vsel %vm759, 1, 0
      %v794 = vsel %vm760, 1, 0
      %v795 = vsel %vm761, 1, 0
      %v796 = vsel %vm762, 1, 0
      %v797 = vsel %vm763, 1, 0
      %v798 = vsel %vm764, 1, 0
      %v799 = vsel %vm765, 1, 0
      %v800 = vsel %vm766, 1, 0
      %v801 = vsel %vm767, 1, 0
      %v802 = vsel %vm768, 1, 0
      %v803 = vsel %vm769, 1, 0
      %v804 = vsel %vm770, 1, 0
      %v805 = vsel %vm771, 1, 0
      %v806 = vsel %vm772, 1, 0
      %v807 = vsel %vm773, 1, 0
      %v808 = vsel %vm774, 1, 0
      %v809 = vsel %vm775, 1, 0
      %v810 = vsel %vm776, 1, 0
      %v811 = vsel %vm777, 1, 0
      %v812 = vsel %vm778, 1, 0
      %v813 = vsel %vm779, 1, 0
      %v814 = vsel %vm780, 1, 0
      %v815 = vsel %vm781, 1, 0
      %v816 = vsel %vm782, 1, 0
      %vm817 = vcmp.eq.s32.totalorder %v785, 1
      %vm818 = vcmp.eq.s32.totalorder %v786, 1
      %vm819 = vcmp.eq.s32.totalorder %v787, 1
      %vm820 = vcmp.eq.s32.totalorder %v788, 1
      %vm821 = vcmp.eq.s32.totalorder %v789, 1
      %vm822 = vcmp.eq.s32.totalorder %v790, 1
      %vm823 = vcmp.eq.s32.totalorder %v791, 1
      %vm824 = vcmp.eq.s32.totalorder %v792, 1
      %vm825 = vcmp.eq.s32.totalorder %v793, 1
      %vm826 = vcmp.eq.s32.totalorder %v794, 1
      %vm827 = vcmp.eq.s32.totalorder %v795, 1
      %vm828 = vcmp.eq.s32.totalorder %v796, 1
      %vm829 = vcmp.eq.s32.totalorder %v797, 1
      %vm830 = vcmp.eq.s32.totalorder %v798, 1
      %vm831 = vcmp.eq.s32.totalorder %v799, 1
      %vm832 = vcmp.eq.s32.totalorder %v800, 1
      %vm833 = vcmp.eq.s32.totalorder %v801, 1
      %vm834 = vcmp.eq.s32.totalorder %v802, 1
      %vm835 = vcmp.eq.s32.totalorder %v803, 1
      %vm836 = vcmp.eq.s32.totalorder %v804, 1
      %vm837 = vcmp.eq.s32.totalorder %v805, 1
      %vm838 = vcmp.eq.s32.totalorder %v806, 1
      %vm839 = vcmp.eq.s32.totalorder %v807, 1
      %vm840 = vcmp.eq.s32.totalorder %v808, 1
      %vm841 = vcmp.eq.s32.totalorder %v809, 1
      %vm842 = vcmp.eq.s32.totalorder %v810, 1
      %vm843 = vcmp.eq.s32.totalorder %v811, 1
      %vm844 = vcmp.eq.s32.totalorder %v812, 1
      %vm845 = vcmp.eq.s32.totalorder %v813, 1
      %vm846 = vcmp.eq.s32.totalorder %v814, 1
      %vm847 = vcmp.eq.s32.totalorder %v815, 1
      %vm848 = vcmp.eq.s32.totalorder %v816, 1
      %v849 = vsel %vm783, 1, 0
      %v850 = vsel %vm784, 1, 0
      %vm851 = vcmp.eq.s32.totalorder %v849, 1
      %vm852 = vcmp.eq.s32.totalorder %v850, 1
      %vm853 = vmand %vm817, %vm851
      %vm854 = vmand %vm817, %vm852
      %vm855 = vmand %vm818, %vm851
      %vm856 = vmand %vm818, %vm852
      %vm857 = vmand %vm819, %vm851
      %vm858 = vmand %vm819, %vm852
      %vm859 = vmand %vm820, %vm851
      %vm860 = vmand %vm820, %vm852
      %vm861 = vmand %vm821, %vm851
      %vm862 = vmand %vm821, %vm852
      %vm863 = vmand %vm822, %vm851
      %vm864 = vmand %vm822, %vm852
      %vm865 = vmand %vm823, %vm851
      %vm866 = vmand %vm823, %vm852
      %vm867 = vmand %vm824, %vm851
      %vm868 = vmand %vm824, %vm852
      %vm869 = vmand %vm825, %vm851
      %vm870 = vmand %vm825, %vm852
      %vm871 = vmand %vm826, %vm851
      %vm872 = vmand %vm826, %vm852
      %vm873 = vmand %vm827, %vm851
      %vm874 = vmand %vm827, %vm852
      %vm875 = vmand %vm828, %vm851
      %vm876 = vmand %vm828, %vm852
      %vm877 = vmand %vm829, %vm851
      %vm878 = vmand %vm829, %vm852
      %vm879 = vmand %vm830, %vm851
      %vm880 = vmand %vm830, %vm852
      %vm881 = vmand %vm831, %vm851
      %vm882 = vmand %vm831, %vm852
      %vm883 = vmand %vm832, %vm851
      %vm884 = vmand %vm832, %vm852
      %vm885 = vmand %vm833, %vm851
      %vm886 = vmand %vm833, %vm852
      %vm887 = vmand %vm834, %vm851
      %vm888 = vmand %vm834, %vm852
      %vm889 = vmand %vm835, %vm851
      %vm890 = vmand %vm835, %vm852
      %vm891 = vmand %vm836, %vm851
      %vm892 = vmand %vm836, %vm852
      %vm893 = vmand %vm837, %vm851
      %vm894 = vmand %vm837, %vm852
      %vm895 = vmand %vm838, %vm851
      %vm896 = vmand %vm838, %vm852
      %vm897 = vmand %vm839, %vm851
      %vm898 = vmand %vm839, %vm852
      %vm899 = vmand %vm840, %vm851
      %vm900 = vmand %vm840, %vm852
      %vm901 = vmand %vm841, %vm851
      %vm902 = vmand %vm841, %vm852
      %vm903 = vmand %vm842, %vm851
      %vm904 = vmand %vm842, %vm852
      %vm905 = vmand %vm843, %vm851
      %vm906 = vmand %vm843, %vm852
      %vm907 = vmand %vm844, %vm851
      %vm908 = vmand %vm844, %vm852
      %vm909 = vmand %vm845, %vm851
      %vm910 = vmand %vm845, %vm852
      %vm911 = vmand %vm846, %vm851
      %vm912 = vmand %vm846, %vm852
      %vm913 = vmand %vm847, %vm851
      %vm914 = vmand %vm847, %vm852
      %vm915 = vmand %vm848, %vm851
      %vm916 = vmand %vm848, %vm852
      %v917 = vsel %vm853, %v469, -inf
      %v918 = vsel %vm854, %v582, -inf
      %v919 = vsel %vm855, %v472, -inf
      %v920 = vsel %vm856, %v585, -inf
      %v921 = vsel %vm857, %v475, -inf
      %v922 = vsel %vm858, %v588, -inf
      %v923 = vsel %vm859, %v478, -inf
      %v924 = vsel %vm860, %v591, -inf
      %v925 = vsel %vm861, %v481, -inf
      %v926 = vsel %vm862, %v594, -inf
      %v927 = vsel %vm863, %v484, -inf
      %v928 = vsel %vm864, %v597, -inf
      %v929 = vsel %vm865, %v487, -inf
      %v930 = vsel %vm866, %v600, -inf
      %v931 = vsel %vm867, %v490, -inf
      %v932 = vsel %vm868, %v603, -inf
      %v933 = vsel %vm869, %v493, -inf
      %v934 = vsel %vm870, %v606, -inf
      %v935 = vsel %vm871, %v496, -inf
      %v936 = vsel %vm872, %v609, -inf
      %v937 = vsel %vm873, %v499, -inf
      %v938 = vsel %vm874, %v612, -inf
      %v939 = vsel %vm875, %v502, -inf
      %v940 = vsel %vm876, %v615, -inf
      %v941 = vsel %vm877, %v505, -inf
      %v942 = vsel %vm878, %v618, -inf
      %v943 = vsel %vm879, %v508, -inf
      %v944 = vsel %vm880, %v621, -inf
      %v945 = vsel %vm881, %v511, -inf
      %v946 = vsel %vm882, %v624, -inf
      %v947 = vsel %vm883, %v514, -inf
      %v948 = vsel %vm884, %v627, -inf
      %v949 = vsel %vm885, %v517, -inf
      %v950 = vsel %vm886, %v630, -inf
      %v951 = vsel %vm887, %v520, -inf
      %v952 = vsel %vm888, %v633, -inf
      %v953 = vsel %vm889, %v523, -inf
      %v954 = vsel %vm890, %v636, -inf
      %v955 = vsel %vm891, %v526, -inf
      %v956 = vsel %vm892, %v639, -inf
      %v957 = vsel %vm893, %v529, -inf
      %v958 = vsel %vm894, %v642, -inf
      %v959 = vsel %vm895, %v532, -inf
      %v960 = vsel %vm896, %v645, -inf
      %v961 = vsel %vm897, %v535, -inf
      %v962 = vsel %vm898, %v648, -inf
      %v963 = vsel %vm899, %v538, -inf
      %v964 = vsel %vm900, %v651, -inf
      %v965 = vsel %vm901, %v541, -inf
      %v966 = vsel %vm902, %v654, -inf
      %v967 = vsel %vm903, %v544, -inf
      %v968 = vsel %vm904, %v657, -inf
      %v969 = vsel %vm905, %v547, -inf
      %v970 = vsel %vm906, %v660, -inf
      %v971 = vsel %vm907, %v550, -inf
      %v972 = vsel %vm908, %v663, -inf
      %v973 = vsel %vm909, %v553, -inf
      %v974 = vsel %vm910, %v666, -inf
      %v975 = vsel %vm911, %v556, -inf
      %v976 = vsel %vm912, %v669, -inf
      %v977 = vsel %vm913, %v559, -inf
      %v978 = vsel %vm914, %v672, -inf
      %v979 = vsel %vm915, %v562, -inf
      %v980 = vsel %vm916, %v675, -inf
      %v981 = vmax.f32 %v917, %v918
      %982 = vmax.xlane.f32.xlu0 %v981
      %v983 = vpop.xlane.xlu0 %982
      %v984 = vmax.f32 %v919, %v920
      %985 = vmax.xlane.f32.xlu0 %v984
      %v986 = vpop.xlane.xlu0 %985
      %v987 = vmax.f32 %v921, %v922
      %988 = vmax.xlane.f32.xlu0 %v987
      %v989 = vpop.xlane.xlu0 %988
      %v990 = vmax.f32 %v923, %v924
      %991 = vmax.xlane.f32.xlu0 %v990
      %v992 = vpop.xlane.xlu0 %991
      %v993 = vmax.f32 %v925, %v926
      %994 = vmax.xlane.f32.xlu0 %v993
      %v995 = vpop.xlane.xlu0 %994
      %v996 = vmax.f32 %v927, %v928
      %997 = vmax.xlane.f32.xlu0 %v996
      %v998 = vpop.xlane.xlu0 %997
      %v999 = vmax.f32 %v929, %v930
      %1000 = vmax.xlane.f32.xlu0 %v999
      %v1001 = vpop.xlane.xlu0 %1000
      %v1002 = vmax.f32 %v931, %v932
      %1003 = vmax.xlane.f32.xlu0 %v1002
      %v1004 = vpop.xlane.xlu0 %1003
      %v1005 = vmax.f32 %v933, %v934
      %1006 = vmax.xlane.f32.xlu0 %v1005
      %v1007 = vpop.xlane.xlu0 %1006
      %v1008 = vmax.f32 %v935, %v936
      %1009 = vmax.xlane.f32.xlu0 %v1008
      %v1010 = vpop.xlane.xlu0 %1009
      %v1011 = vmax.f32 %v937, %v938
      %1012 = vmax.xlane.f32.xlu0 %v1011
      %v1013 = vpop.xlane.xlu0 %1012
      %v1014 = vmax.f32 %v939, %v940
      %1015 = vmax.xlane.f32.xlu0 %v1014
      %v1016 = vpop.xlane.xlu0 %1015
      %v1017 = vmax.f32 %v941, %v942
      %1018 = vmax.xlane.f32.xlu0 %v1017
      %v1019 = vpop.xlane.xlu0 %1018
      %v1020 = vmax.f32 %v943, %v944
      %1021 = vmax.xlane.f32.xlu0 %v1020
      %v1022 = vpop.xlane.xlu0 %1021
      %v1023 = vmax.f32 %v945, %v946
      %1024 = vmax.xlane.f32.xlu0 %v1023
      %v1025 = vpop.xlane.xlu0 %1024
      %v1026 = vmax.f32 %v947, %v948
      %1027 = vmax.xlane.f32.xlu0 %v1026
      %v1028 = vpop.xlane.xlu0 %1027
      %v1029 = vmax.f32 %v949, %v950
      %1030 = vmax.xlane.f32.xlu0 %v1029
      %v1031 = vpop.xlane.xlu0 %1030
      %v1032 = vmax.f32 %v951, %v952
      %1033 = vmax.xlane.f32.xlu0 %v1032
      %v1034 = vpop.xlane.xlu0 %1033
      %v1035 = vmax.f32 %v953, %v954
      %1036 = vmax.xlane.f32.xlu0 %v1035
      %v1037 = vpop.xlane.xlu0 %1036
      %v1038 = vmax.f32 %v955, %v956
      %1039 = vmax.xlane.f32.xlu0 %v1038
      %v1040 = vpop.xlane.xlu0 %1039
      %v1041 = vmax.f32 %v957, %v958
      %1042 = vmax.xlane.f32.xlu0 %v1041
      %v1043 = vpop.xlane.xlu0 %1042
      %v1044 = vmax.f32 %v959, %v960
      %1045 = vmax.xlane.f32.xlu0 %v1044
      %v1046 = vpop.xlane.xlu0 %1045
      %v1047 = vmax.f32 %v961, %v962
      %1048 = vmax.xlane.f32.xlu0 %v1047
      %v1049 = vpop.xlane.xlu0 %1048
      %v1050 = vmax.f32 %v963, %v964
      %1051 = vmax.xlane.f32.xlu0 %v1050
      %v1052 = vpop.xlane.xlu0 %1051
      %v1053 = vmax.f32 %v965, %v966
      %1054 = vmax.xlane.f32.xlu0 %v1053
      %v1055 = vpop.xlane.xlu0 %1054
      %v1056 = vmax.f32 %v967, %v968
      %1057 = vmax.xlane.f32.xlu0 %v1056
      %v1058 = vpop.xlane.xlu0 %1057
      %v1059 = vmax.f32 %v969, %v970
      %1060 = vmax.xlane.f32.xlu0 %v1059
      %v1061 = vpop.xlane.xlu0 %1060
      %v1062 = vmax.f32 %v971, %v972
      %1063 = vmax.xlane.f32.xlu0 %v1062
      %v1064 = vpop.xlane.xlu0 %1063
      %v1065 = vmax.f32 %v973, %v974
      %1066 = vmax.xlane.f32.xlu0 %v1065
      %v1067 = vpop.xlane.xlu0 %1066
      %v1068 = vmax.f32 %v975, %v976
      %1069 = vmax.xlane.f32.xlu0 %v1068
      %v1070 = vpop.xlane.xlu0 %1069
      %v1071 = vmax.f32 %v977, %v978
      %1072 = vmax.xlane.f32.xlu0 %v1071
      %v1073 = vpop.xlane.xlu0 %1072
      %v1074 = vmax.f32 %v979, %v980
      %1075 = vmax.xlane.f32.xlu0 %v1074
      %v1076 = vpop.xlane.xlu0 %1075
      %vm1077 = vcmp.ge.f32.partialorder %v917, %v918
      %v1078 = vsel %vm1077, %v917, %v918
      %v1079 = vsel %vm1077, %v746, %v747
      %1080 = vmax.index.xlane.f32.xlu0 %v1078
      %v1081 = vpop.xlane.xlu0 %1080
      %1082 = vset.pattern.permute.xlu0 %v1081
      %1083 = vperm.xlu0 %1082, %v1079
      %v1084 = vpop.permute.xlu0 %1083
      %vm1085 = vcmp.ge.f32.partialorder %v919, %v920
      %v1086 = vsel %vm1085, %v919, %v920
      %v1087 = vsel %vm1085, %v746, %v747
      %1088 = vmax.index.xlane.f32.xlu0 %v1086
      %v1089 = vpop.xlane.xlu0 %1088
      %1090 = vset.pattern.permute.xlu0 %v1089
      %1091 = vperm.xlu0 %1090, %v1087
      %v1092 = vpop.permute.xlu0 %1091
      %vm1093 = vcmp.ge.f32.partialorder %v921, %v922
      %v1094 = vsel %vm1093, %v921, %v922
      %v1095 = vsel %vm1093, %v746, %v747
      %1096 = vmax.index.xlane.f32.xlu0 %v1094
      %v1097 = vpop.xlane.xlu0 %1096
      %1098 = vset.pattern.permute.xlu0 %v1097
      %1099 = vperm.xlu0 %1098, %v1095
      %v1100 = vpop.permute.xlu0 %1099
      %vm1101 = vcmp.ge.f32.partialorder %v923, %v924
      %v1102 = vsel %vm1101, %v923, %v924
      %v1103 = vsel %vm1101, %v746, %v747
      %1104 = vmax.index.xlane.f32.xlu0 %v1102
      %v1105 = vpop.xlane.xlu0 %1104
      %1106 = vset.pattern.permute.xlu0 %v1105
      %1107 = vperm.xlu0 %1106, %v1103
      %v1108 = vpop.permute.xlu0 %1107
      %vm1109 = vcmp.ge.f32.partialorder %v925, %v926
      %v1110 = vsel %vm1109, %v925, %v926
      %v1111 = vsel %vm1109, %v746, %v747
      %1112 = vmax.index.xlane.f32.xlu0 %v1110
      %v1113 = vpop.xlane.xlu0 %1112
      %1114 = vset.pattern.permute.xlu0 %v1113
      %1115 = vperm.xlu0 %1114, %v1111
      %v1116 = vpop.permute.xlu0 %1115
      %vm1117 = vcmp.ge.f32.partialorder %v927, %v928
      %v1118 = vsel %vm1117, %v927, %v928
      %v1119 = vsel %vm1117, %v746, %v747
      %1120 = vmax.index.xlane.f32.xlu0 %v1118
      %v1121 = vpop.xlane.xlu0 %1120
      %1122 = vset.pattern.permute.xlu0 %v1121
      %1123 = vperm.xlu0 %1122, %v1119
      %v1124 = vpop.permute.xlu0 %1123
      %vm1125 = vcmp.ge.f32.partialorder %v929, %v930
      %v1126 = vsel %vm1125, %v929, %v930
      %v1127 = vsel %vm1125, %v746, %v747
      %1128 = vmax.index.xlane.f32.xlu0 %v1126
      %v1129 = vpop.xlane.xlu0 %1128
      %1130 = vset.pattern.permute.xlu0 %v1129
      %1131 = vperm.xlu0 %1130, %v1127
      %v1132 = vpop.permute.xlu0 %1131
      %vm1133 = vcmp.ge.f32.partialorder %v931, %v932
      %v1134 = vsel %vm1133, %v931, %v932
      %v1135 = vsel %vm1133, %v746, %v747
      %1136 = vmax.index.xlane.f32.xlu0 %v1134
      %v1137 = vpop.xlane.xlu0 %1136
      %1138 = vset.pattern.permute.xlu0 %v1137
      %1139 = vperm.xlu0 %1138, %v1135
      %v1140 = vpop.permute.xlu0 %1139
      %vm1141 = vcmp.ge.f32.partialorder %v933, %v934
      %v1142 = vsel %vm1141, %v933, %v934
      %v1143 = vsel %vm1141, %v746, %v747
      %1144 = vmax.index.xlane.f32.xlu0 %v1142
      %v1145 = vpop.xlane.xlu0 %1144
      %1146 = vset.pattern.permute.xlu0 %v1145
      %1147 = vperm.xlu0 %1146, %v1143
      %v1148 = vpop.permute.xlu0 %1147
      %vm1149 = vcmp.ge.f32.partialorder %v935, %v936
      %v1150 = vsel %vm1149, %v935, %v936
      %v1151 = vsel %vm1149, %v746, %v747
      %1152 = vmax.index.xlane.f32.xlu0 %v1150
      %v1153 = vpop.xlane.xlu0 %1152
      %1154 = vset.pattern.permute.xlu0 %v1153
      %1155 = vperm.xlu0 %1154, %v1151
      %v1156 = vpop.permute.xlu0 %1155
      %vm1157 = vcmp.ge.f32.partialorder %v937, %v938
      %v1158 = vsel %vm1157, %v937, %v938
      %v1159 = vsel %vm1157, %v746, %v747
      %1160 = vmax.index.xlane.f32.xlu0 %v1158
      %v1161 = vpop.xlane.xlu0 %1160
      %1162 = vset.pattern.permute.xlu0 %v1161
      %1163 = vperm.xlu0 %1162, %v1159
      %v1164 = vpop.permute.xlu0 %1163
      %vm1165 = vcmp.ge.f32.partialorder %v939, %v940
      %v1166 = vsel %vm1165, %v939, %v940
      %v1167 = vsel %vm1165, %v746, %v747
      %1168 = vmax.index.xlane.f32.xlu0 %v1166
      %v1169 = vpop.xlane.xlu0 %1168
      %1170 = vset.pattern.permute.xlu0 %v1169
      %1171 = vperm.xlu0 %1170, %v1167
      %v1172 = vpop.permute.xlu0 %1171
      %vm1173 = vcmp.ge.f32.partialorder %v941, %v942
      %v1174 = vsel %vm1173, %v941, %v942
      %v1175 = vsel %vm1173, %v746, %v747
      %1176 = vmax.index.xlane.f32.xlu0 %v1174
      %v1177 = vpop.xlane.xlu0 %1176
      %1178 = vset.pattern.permute.xlu0 %v1177
      %1179 = vperm.xlu0 %1178, %v1175
      %v1180 = vpop.permute.xlu0 %1179
      %vm1181 = vcmp.ge.f32.partialorder %v943, %v944
      %v1182 = vsel %vm1181, %v943, %v944
      %v1183 = vsel %vm1181, %v746, %v747
      %1184 = vmax.index.xlane.f32.xlu0 %v1182
      %v1185 = vpop.xlane.xlu0 %1184
      %1186 = vset.pattern.permute.xlu0 %v1185
      %1187 = vperm.xlu0 %1186, %v1183
      %v1188 = vpop.permute.xlu0 %1187
      %vm1189 = vcmp.ge.f32.partialorder %v945, %v946
      %v1190 = vsel %vm1189, %v945, %v946
      %v1191 = vsel %vm1189, %v746, %v747
      %1192 = vmax.index.xlane.f32.xlu0 %v1190
      %v1193 = vpop.xlane.xlu0 %1192
      %1194 = vset.pattern.permute.xlu0 %v1193
      %1195 = vperm.xlu0 %1194, %v1191
      %v1196 = vpop.permute.xlu0 %1195
      %vm1197 = vcmp.ge.f32.partialorder %v947, %v948
      %v1198 = vsel %vm1197, %v947, %v948
      %v1199 = vsel %vm1197, %v746, %v747
      %1200 = vmax.index.xlane.f32.xlu0 %v1198
      %v1201 = vpop.xlane.xlu0 %1200
      %1202 = vset.pattern.permute.xlu0 %v1201
      %1203 = vperm.xlu0 %1202, %v1199
      %v1204 = vpop.permute.xlu0 %1203
      %vm1205 = vcmp.ge.f32.partialorder %v949, %v950
      %v1206 = vsel %vm1205, %v949, %v950
      %v1207 = vsel %vm1205, %v746, %v747
      %1208 = vmax.index.xlane.f32.xlu0 %v1206
      %v1209 = vpop.xlane.xlu0 %1208
      %1210 = vset.pattern.permute.xlu0 %v1209
      %1211 = vperm.xlu0 %1210, %v1207
      %v1212 = vpop.permute.xlu0 %1211
      %vm1213 = vcmp.ge.f32.partialorder %v951, %v952
      %v1214 = vsel %vm1213, %v951, %v952
      %v1215 = vsel %vm1213, %v746, %v747
      %1216 = vmax.index.xlane.f32.xlu0 %v1214
      %v1217 = vpop.xlane.xlu0 %1216
      %1218 = vset.pattern.permute.xlu0 %v1217
      %1219 = vperm.xlu0 %1218, %v1215
      %v1220 = vpop.permute.xlu0 %1219
      %vm1221 = vcmp.ge.f32.partialorder %v953, %v954
      %v1222 = vsel %vm1221, %v953, %v954
      %v1223 = vsel %vm1221, %v746, %v747
      %1224 = vmax.index.xlane.f32.xlu0 %v1222
      %v1225 = vpop.xlane.xlu0 %1224
      %1226 = vset.pattern.permute.xlu0 %v1225
      %1227 = vperm.xlu0 %1226, %v1223
      %v1228 = vpop.permute.xlu0 %1227
      %vm1229 = vcmp.ge.f32.partialorder %v955, %v956
      %v1230 = vsel %vm1229, %v955, %v956
      %v1231 = vsel %vm1229, %v746, %v747
      %1232 = vmax.index.xlane.f32.xlu0 %v1230
      %v1233 = vpop.xlane.xlu0 %1232
      %1234 = vset.pattern.permute.xlu0 %v1233
      %1235 = vperm.xlu0 %1234, %v1231
      %v1236 = vpop.permute.xlu0 %1235
      %vm1237 = vcmp.ge.f32.partialorder %v957, %v958
      %v1238 = vsel %vm1237, %v957, %v958
      %v1239 = vsel %vm1237, %v746, %v747
      %1240 = vmax.index.xlane.f32.xlu0 %v1238
      %v1241 = vpop.xlane.xlu0 %1240
      %1242 = vset.pattern.permute.xlu0 %v1241
      %1243 = vperm.xlu0 %1242, %v1239
      %v1244 = vpop.permute.xlu0 %1243
      %vm1245 = vcmp.ge.f32.partialorder %v959, %v960
      %v1246 = vsel %vm1245, %v959, %v960
      %v1247 = vsel %vm1245, %v746, %v747
      %1248 = vmax.index.xlane.f32.xlu0 %v1246
      %v1249 = vpop.xlane.xlu0 %1248
      %1250 = vset.pattern.permute.xlu0 %v1249
      %1251 = vperm.xlu0 %1250, %v1247
      %v1252 = vpop.permute.xlu0 %1251
      %vm1253 = vcmp.ge.f32.partialorder %v961, %v962
      %v1254 = vsel %vm1253, %v961, %v962
      %v1255 = vsel %vm1253, %v746, %v747
      %1256 = vmax.index.xlane.f32.xlu0 %v1254
      %v1257 = vpop.xlane.xlu0 %1256
      %1258 = vset.pattern.permute.xlu0 %v1257
      %1259 = vperm.xlu0 %1258, %v1255
      %v1260 = vpop.permute.xlu0 %1259
      %vm1261 = vcmp.ge.f32.partialorder %v963, %v964
      %v1262 = vsel %vm1261, %v963, %v964
      %v1263 = vsel %vm1261, %v746, %v747
      %1264 = vmax.index.xlane.f32.xlu0 %v1262
      %v1265 = vpop.xlane.xlu0 %1264
      %1266 = vset.pattern.permute.xlu0 %v1265
      %1267 = vperm.xlu0 %1266, %v1263
      %v1268 = vpop.permute.xlu0 %1267
      %vm1269 = vcmp.ge.f32.partialorder %v965, %v966
      %v1270 = vsel %vm1269, %v965, %v966
      %v1271 = vsel %vm1269, %v746, %v747
      %1272 = vmax.index.xlane.f32.xlu0 %v1270
      %v1273 = vpop.xlane.xlu0 %1272
      %1274 = vset.pattern.permute.xlu0 %v1273
      %1275 = vperm.xlu0 %1274, %v1271
      %v1276 = vpop.permute.xlu0 %1275
      %vm1277 = vcmp.ge.f32.partialorder %v967, %v968
      %v1278 = vsel %vm1277, %v967, %v968
      %v1279 = vsel %vm1277, %v746, %v747
      %1280 = vmax.index.xlane.f32.xlu0 %v1278
      %v1281 = vpop.xlane.xlu0 %1280
      %1282 = vset.pattern.permute.xlu0 %v1281
      %1283 = vperm.xlu0 %1282, %v1279
      %v1284 = vpop.permute.xlu0 %1283
      %vm1285 = vcmp.ge.f32.partialorder %v969, %v970
      %v1286 = vsel %vm1285, %v969, %v970
      %v1287 = vsel %vm1285, %v746, %v747
      %1288 = vmax.index.xlane.f32.xlu0 %v1286
      %v1289 = vpop.xlane.xlu0 %1288
      %1290 = vset.pattern.permute.xlu0 %v1289
      %1291 = vperm.xlu0 %1290, %v1287
      %v1292 = vpop.permute.xlu0 %1291
      %vm1293 = vcmp.ge.f32.partialorder %v971, %v972
      %v1294 = vsel %vm1293, %v971, %v972
      %v1295 = vsel %vm1293, %v746, %v747
      %1296 = vmax.index.xlane.f32.xlu0 %v1294
      %v1297 = vpop.xlane.xlu0 %1296
      %1298 = vset.pattern.permute.xlu0 %v1297
      %1299 = vperm.xlu0 %1298, %v1295
      %v1300 = vpop.permute.xlu0 %1299
      %vm1301 = vcmp.ge.f32.partialorder %v973, %v974
      %v1302 = vsel %vm1301, %v973, %v974
      %v1303 = vsel %vm1301, %v746, %v747
      %1304 = vmax.index.xlane.f32.xlu0 %v1302
      %v1305 = vpop.xlane.xlu0 %1304
      %1306 = vset.pattern.permute.xlu0 %v1305
      %1307 = vperm.xlu0 %1306, %v1303
      %v1308 = vpop.permute.xlu0 %1307
      %vm1309 = vcmp.ge.f32.partialorder %v975, %v976
      %v1310 = vsel %vm1309, %v975, %v976
      %v1311 = vsel %vm1309, %v746, %v747
      %1312 = vmax.index.xlane.f32.xlu0 %v1310
      %v1313 = vpop.xlane.xlu0 %1312
      %1314 = vset.pattern.permute.xlu0 %v1313
      %1315 = vperm.xlu0 %1314, %v1311
      %v1316 = vpop.permute.xlu0 %1315
      %vm1317 = vcmp.ge.f32.partialorder %v977, %v978
      %v1318 = vsel %vm1317, %v977, %v978
      %v1319 = vsel %vm1317, %v746, %v747
      %1320 = vmax.index.xlane.f32.xlu0 %v1318
      %v1321 = vpop.xlane.xlu0 %1320
      %1322 = vset.pattern.permute.xlu0 %v1321
      %1323 = vperm.xlu0 %1322, %v1319
      %v1324 = vpop.permute.xlu0 %1323
      %vm1325 = vcmp.ge.f32.partialorder %v979, %v980
      %v1326 = vsel %vm1325, %v979, %v980
      %v1327 = vsel %vm1325, %v746, %v747
      %1328 = vmax.index.xlane.f32.xlu0 %v1326
      %v1329 = vpop.xlane.xlu0 %1328
      %1330 = vset.pattern.permute.xlu0 %v1329
      %1331 = vperm.xlu0 %1330, %v1327
      %v1332 = vpop.permute.xlu0 %1331
      %v1333 = vadd.s32 %v748, %v1084
      %v1334 = vadd.s32 %v748, %v1092
      %v1335 = vadd.s32 %v748, %v1100
      %v1336 = vadd.s32 %v748, %v1108
      %v1337 = vadd.s32 %v748, %v1116
      %v1338 = vadd.s32 %v748, %v1124
      %v1339 = vadd.s32 %v748, %v1132
      %v1340 = vadd.s32 %v748, %v1140
      %v1341 = vadd.s32 %v748, %v1148
      %v1342 = vadd.s32 %v748, %v1156
      %v1343 = vadd.s32 %v748, %v1164
      %v1344 = vadd.s32 %v748, %v1172
      %v1345 = vadd.s32 %v748, %v1180
      %v1346 = vadd.s32 %v748, %v1188
      %v1347 = vadd.s32 %v748, %v1196
      %v1348 = vadd.s32 %v748, %v1204
      %v1349 = vadd.s32 %v748, %v1212
      %v1350 = vadd.s32 %v748, %v1220
      %v1351 = vadd.s32 %v748, %v1228
      %v1352 = vadd.s32 %v748, %v1236
      %v1353 = vadd.s32 %v748, %v1244
      %v1354 = vadd.s32 %v748, %v1252
      %v1355 = vadd.s32 %v748, %v1260
      %v1356 = vadd.s32 %v748, %v1268
      %v1357 = vadd.s32 %v748, %v1276
      %v1358 = vadd.s32 %v748, %v1284
      %v1359 = vadd.s32 %v748, %v1292
      %v1360 = vadd.s32 %v748, %v1300
      %v1361 = vadd.s32 %v748, %v1308
      %v1362 = vadd.s32 %v748, %v1316
      %v1363 = vadd.s32 %v748, %v1324
      %v1364 = vadd.s32 %v748, %v1332
      %v1365 = vld [vmem:[%s298] sm:$0xff]
      %v1366 = vld [vmem:[%s298 + $0x8] sm:$0xff]
      %v1367 = vld [vmem:[%s298 + $0x10] sm:$0xff]
      %v1368 = vld [vmem:[%s298 + $0x18] sm:$0xff]
      %v1369 = vld [vmem:[%s298 + $0x20] sm:$0xff]
      %v1370 = vld [vmem:[%s298 + $0x28] sm:$0xff]
      %v1371 = vld [vmem:[%s298 + $0x30] sm:$0xff]
      %v1372 = vld [vmem:[%s298 + $0x38] sm:$0xff]
      %v1373 = vld [vmem:[%s298 + $0x40] sm:$0xff]
      %v1374 = vld [vmem:[%s298 + $0x48] sm:$0xff]
      %v1375 = vld [vmem:[%s298 + $0x50] sm:$0xff]
      %v1376 = vld [vmem:[%s298 + $0x58] sm:$0xff]
      %v1377 = vld [vmem:[%s298 + $0x60] sm:$0xff]
      %v1378 = vld [vmem:[%s298 + $0x68] sm:$0xff]
      %v1379 = vld [vmem:[%s298 + $0x70] sm:$0xff]
      %v1380 = vld [vmem:[%s298 + $0x78] sm:$0xff]
      %v1381 = vld [vmem:[%s298 + $0x80] sm:$0xff]
      %v1382 = vld [vmem:[%s298 + $0x88] sm:$0xff]
      %v1383 = vld [vmem:[%s298 + $0x90] sm:$0xff]
      %v1384 = vld [vmem:[%s298 + $0x98] sm:$0xff]
      %v1385 = vld [vmem:[%s298 + $0xa0] sm:$0xff]
      %v1386 = vld [vmem:[%s298 + $0xa8] sm:$0xff]
      %v1387 = vld [vmem:[%s298 + $0xb0] sm:$0xff]
      %v1388 = vld [vmem:[%s298 + $0xb8] sm:$0xff]
      %v1389 = vld [vmem:[%s298 + $0xc0] sm:$0xff]
      %v1390 = vld [vmem:[%s298 + $0xc8] sm:$0xff]
      %v1391 = vld [vmem:[%s298 + $0xd0] sm:$0xff]
      %v1392 = vld [vmem:[%s298 + $0xd8] sm:$0xff]
      %v1393 = vld [vmem:[%s298 + $0xe0] sm:$0xff]
      %v1394 = vld [vmem:[%s298 + $0xe8] sm:$0xff]
      %v1395 = vld [vmem:[%s298 + $0xf0] sm:$0xff]
      %v1396 = vld [vmem:[%s298 + $0xf8] sm:$0xff]
      %vm1397 = vcmp.gt.f32.partialorder %v983, %v1365
      %vm1398 = vcmp.gt.f32.partialorder %v986, %v1366
      %vm1399 = vcmp.gt.f32.partialorder %v989, %v1367
      %vm1400 = vcmp.gt.f32.partialorder %v992, %v1368
      %vm1401 = vcmp.gt.f32.partialorder %v995, %v1369
      %vm1402 = vcmp.gt.f32.partialorder %v998, %v1370
      %vm1403 = vcmp.gt.f32.partialorder %v1001, %v1371
      %vm1404 = vcmp.gt.f32.partialorder %v1004, %v1372
      %vm1405 = vcmp.gt.f32.partialorder %v1007, %v1373
      %vm1406 = vcmp.gt.f32.partialorder %v1010, %v1374
      %vm1407 = vcmp.gt.f32.partialorder %v1013, %v1375
      %vm1408 = vcmp.gt.f32.partialorder %v1016, %v1376
      %vm1409 = vcmp.gt.f32.partialorder %v1019, %v1377
      %vm1410 = vcmp.gt.f32.partialorder %v1022, %v1378
      %vm1411 = vcmp.gt.f32.partialorder %v1025, %v1379
      %vm1412 = vcmp.gt.f32.partialorder %v1028, %v1380
      %vm1413 = vcmp.gt.f32.partialorder %v1031, %v1381
      %vm1414 = vcmp.gt.f32.partialorder %v1034, %v1382
      %vm1415 = vcmp.gt.f32.partialorder %v1037, %v1383
      %vm1416 = vcmp.gt.f32.partialorder %v1040, %v1384
      %vm1417 = vcmp.gt.f32.partialorder %v1043, %v1385
      %vm1418 = vcmp.gt.f32.partialorder %v1046, %v1386
      %vm1419 = vcmp.gt.f32.partialorder %v1049, %v1387
      %vm1420 = vcmp.gt.f32.partialorder %v1052, %v1388
      %vm1421 = vcmp.gt.f32.partialorder %v1055, %v1389
      %vm1422 = vcmp.gt.f32.partialorder %v1058, %v1390
      %vm1423 = vcmp.gt.f32.partialorder %v1061, %v1391
      %vm1424 = vcmp.gt.f32.partialorder %v1064, %v1392
      %vm1425 = vcmp.gt.f32.partialorder %v1067, %v1393
      %vm1426 = vcmp.gt.f32.partialorder %v1070, %v1394
      %vm1427 = vcmp.gt.f32.partialorder %v1073, %v1395
      %vm1428 = vcmp.gt.f32.partialorder %v1076, %v1396
      %v1429 = vsel %vm1397, %v983, %v1365
      %v1430 = vsel %vm1398, %v986, %v1366
      %v1431 = vsel %vm1399, %v989, %v1367
      %v1432 = vsel %vm1400, %v992, %v1368
      %v1433 = vsel %vm1401, %v995, %v1369
      %v1434 = vsel %vm1402, %v998, %v1370
      %v1435 = vsel %vm1403, %v1001, %v1371
      %v1436 = vsel %vm1404, %v1004, %v1372
      %v1437 = vsel %vm1405, %v1007, %v1373
      %v1438 = vsel %vm1406, %v1010, %v1374
      %v1439 = vsel %vm1407, %v1013, %v1375
      %v1440 = vsel %vm1408, %v1016, %v1376
      %v1441 = vsel %vm1409, %v1019, %v1377
      %v1442 = vsel %vm1410, %v1022, %v1378
      %v1443 = vsel %vm1411, %v1025, %v1379
      %v1444 = vsel %vm1412, %v1028, %v1380
      %v1445 = vsel %vm1413, %v1031, %v1381
      %v1446 = vsel %vm1414, %v1034, %v1382
      %v1447 = vsel %vm1415, %v1037, %v1383
      %v1448 = vsel %vm1416, %v1040, %v1384
      %v1449 = vsel %vm1417, %v1043, %v1385
      %v1450 = vsel %vm1418, %v1046, %v1386
      %v1451 = vsel %vm1419, %v1049, %v1387
      %v1452 = vsel %vm1420, %v1052, %v1388
      %v1453 = vsel %vm1421, %v1055, %v1389
      %v1454 = vsel %vm1422, %v1058, %v1390
      %v1455 = vsel %vm1423, %v1061, %v1391
      %v1456 = vsel %vm1424, %v1064, %v1392
      %v1457 = vsel %vm1425, %v1067, %v1393
      %v1458 = vsel %vm1426, %v1070, %v1394
      %v1459 = vsel %vm1427, %v1073, %v1395
      %v1460 = vsel %vm1428, %v1076, %v1396
      %vm1461 = vcmask 7168
      %1462 = vst.msk [vmem:[%s298] sm:$0xff] %vm1461, %v1429
      %1463 = vst.msk [vmem:[%s298 + $0x8] sm:$0xff] %vm1461, %v1430
      %1464 = vst.msk [vmem:[%s298 + $0x10] sm:$0xff] %vm1461, %v1431
      %1465 = vst.msk [vmem:[%s298 + $0x18] sm:$0xff] %vm1461, %v1432
      %1466 = vst.msk [vmem:[%s298 + $0x20] sm:$0xff] %vm1461, %v1433
      %1467 = vst.msk [vmem:[%s298 + $0x28] sm:$0xff] %vm1461, %v1434
      %1468 = vst.msk [vmem:[%s298 + $0x30] sm:$0xff] %vm1461, %v1435
      %1469 = vst.msk [vmem:[%s298 + $0x38] sm:$0xff] %vm1461, %v1436
      %1470 = vst.msk [vmem:[%s298 + $0x40] sm:$0xff] %vm1461, %v1437
      %1471 = vst.msk [vmem:[%s298 + $0x48] sm:$0xff] %vm1461, %v1438
      %1472 = vst.msk [vmem:[%s298 + $0x50] sm:$0xff] %vm1461, %v1439
      %1473 = vst.msk [vmem:[%s298 + $0x58] sm:$0xff] %vm1461, %v1440
      %1474 = vst.msk [vmem:[%s298 + $0x60] sm:$0xff] %vm1461, %v1441
      %1475 = vst.msk [vmem:[%s298 + $0x68] sm:$0xff] %vm1461, %v1442
      %1476 = vst.msk [vmem:[%s298 + $0x70] sm:$0xff] %vm1461, %v1443
      %1477 = vst.msk [vmem:[%s298 + $0x78] sm:$0xff] %vm1461, %v1444
      %1478 = vst.msk [vmem:[%s298 + $0x80] sm:$0xff] %vm1461, %v1445
      %1479 = vst.msk [vmem:[%s298 + $0x88] sm:$0xff] %vm1461, %v1446
      %1480 = vst.msk [vmem:[%s298 + $0x90] sm:$0xff] %vm1461, %v1447
      %1481 = vst.msk [vmem:[%s298 + $0x98] sm:$0xff] %vm1461, %v1448
      %1482 = vst.msk [vmem:[%s298 + $0xa0] sm:$0xff] %vm1461, %v1449
      %1483 = vst.msk [vmem:[%s298 + $0xa8] sm:$0xff] %vm1461, %v1450
      %1484 = vst.msk [vmem:[%s298 + $0xb0] sm:$0xff] %vm1461, %v1451
      %1485 = vst.msk [vmem:[%s298 + $0xb8] sm:$0xff] %vm1461, %v1452
      %1486 = vst.msk [vmem:[%s298 + $0xc0] sm:$0xff] %vm1461, %v1453
      %1487 = vst.msk [vmem:[%s298 + $0xc8] sm:$0xff] %vm1461, %v1454
      %1488 = vst.msk [vmem:[%s298 + $0xd0] sm:$0xff] %vm1461, %v1455
      %1489 = vst.msk [vmem:[%s298 + $0xd8] sm:$0xff] %vm1461, %v1456
      %1490 = vst.msk [vmem:[%s298 + $0xe0] sm:$0xff] %vm1461, %v1457
      %1491 = vst.msk [vmem:[%s298 + $0xe8] sm:$0xff] %vm1461, %v1458
      %1492 = vst.msk [vmem:[%s298 + $0xf0] sm:$0xff] %vm1461, %v1459
      %1493 = vst.msk [vmem:[%s298 + $0xf8] sm:$0xff] %vm1461, %v1460
      %v1494 = vld [vmem:[%s292] sm:$0xff]
      %v1495 = vld [vmem:[%s292 + $0x8] sm:$0xff]
      %v1496 = vld [vmem:[%s292 + $0x10] sm:$0xff]
      %v1497 = vld [vmem:[%s292 + $0x18] sm:$0xff]
      %v1498 = vld [vmem:[%s292 + $0x20] sm:$0xff]
      %v1499 = vld [vmem:[%s292 + $0x28] sm:$0xff]
      %v1500 = vld [vmem:[%s292 + $0x30] sm:$0xff]
      %v1501 = vld [vmem:[%s292 + $0x38] sm:$0xff]
      %v1502 = vld [vmem:[%s292 + $0x40] sm:$0xff]
      %v1503 = vld [vmem:[%s292 + $0x48] sm:$0xff]
      %v1504 = vld [vmem:[%s292 + $0x50] sm:$0xff]
      %v1505 = vld [vmem:[%s292 + $0x58] sm:$0xff]
      %v1506 = vld [vmem:[%s292 + $0x60] sm:$0xff]
      %v1507 = vld [vmem:[%s292 + $0x68] sm:$0xff]
      %v1508 = vld [vmem:[%s292 + $0x70] sm:$0xff]
      %v1509 = vld [vmem:[%s292 + $0x78] sm:$0xff]
      %v1510 = vld [vmem:[%s292 + $0x80] sm:$0xff]
      %v1511 = vld [vmem:[%s292 + $0x88] sm:$0xff]
      %v1512 = vld [vmem:[%s292 + $0x90] sm:$0xff]
      %v1513 = vld [vmem:[%s292 + $0x98] sm:$0xff]
      %v1514 = vld [vmem:[%s292 + $0xa0] sm:$0xff]
      %v1515 = vld [vmem:[%s292 + $0xa8] sm:$0xff]
      %v1516 = vld [vmem:[%s292 + $0xb0] sm:$0xff]
      %v1517 = vld [vmem:[%s292 + $0xb8] sm:$0xff]
      %v1518 = vld [vmem:[%s292 + $0xc0] sm:$0xff]
      %v1519 = vld [vmem:[%s292 + $0xc8] sm:$0xff]
      %v1520 = vld [vmem:[%s292 + $0xd0] sm:$0xff]
      %v1521 = vld [vmem:[%s292 + $0xd8] sm:$0xff]
      %v1522 = vld [vmem:[%s292 + $0xe0] sm:$0xff]
      %v1523 = vld [vmem:[%s292 + $0xe8] sm:$0xff]
      %v1524 = vld [vmem:[%s292 + $0xf0] sm:$0xff]
      %v1525 = vld [vmem:[%s292 + $0xf8] sm:$0xff]
      %v1526 = vsel %vm1397, %v1333, %v1494
      %v1527 = vsel %vm1398, %v1334, %v1495
      %v1528 = vsel %vm1399, %v1335, %v1496
      %v1529 = vsel %vm1400, %v1336, %v1497
      %v1530 = vsel %vm1401, %v1337, %v1498
      %v1531 = vsel %vm1402, %v1338, %v1499
      %v1532 = vsel %vm1403, %v1339, %v1500
      %v1533 = vsel %vm1404, %v1340, %v1501
      %v1534 = vsel %vm1405, %v1341, %v1502
      %v1535 = vsel %vm1406, %v1342, %v1503
      %v1536 = vsel %vm1407, %v1343, %v1504
      %v1537 = vsel %vm1408, %v1344, %v1505
      %v1538 = vsel %vm1409, %v1345, %v1506
      %v1539 = vsel %vm1410, %v1346, %v1507
      %v1540 = vsel %vm1411, %v1347, %v1508
      %v1541 = vsel %vm1412, %v1348, %v1509
      %v1542 = vsel %vm1413, %v1349, %v1510
      %v1543 = vsel %vm1414, %v1350, %v1511
      %v1544 = vsel %vm1415, %v1351, %v1512
      %v1545 = vsel %vm1416, %v1352, %v1513
      %v1546 = vsel %vm1417, %v1353, %v1514
      %v1547 = vsel %vm1418, %v1354, %v1515
      %v1548 = vsel %vm1419, %v1355, %v1516
      %v1549 = vsel %vm1420, %v1356, %v1517
      %v1550 = vsel %vm1421, %v1357, %v1518
      %v1551 = vsel %vm1422, %v1358, %v1519
      %v1552 = vsel %vm1423, %v1359, %v1520
      %v1553 = vsel %vm1424, %v1360, %v1521
      %v1554 = vsel %vm1425, %v1361, %v1522
      %v1555 = vsel %vm1426, %v1362, %v1523
      %v1556 = vsel %vm1427, %v1363, %v1524
      %v1557 = vsel %vm1428, %v1364, %v1525
      %1558 = vst.msk [vmem:[%s292] sm:$0xff] %vm1461, %v1526
      %1559 = vst.msk [vmem:[%s292 + $0x8] sm:$0xff] %vm1461, %v1527
      %1560 = vst.msk [vmem:[%s292 + $0x10] sm:$0xff] %vm1461, %v1528
      %1561 = vst.msk [vmem:[%s292 + $0x18] sm:$0xff] %vm1461, %v1529
      %1562 = vst.msk [vmem:[%s292 + $0x20] sm:$0xff] %vm1461, %v1530
      %1563 = vst.msk [vmem:[%s292 + $0x28] sm:$0xff] %vm1461, %v1531
      %1564 = vst.msk [vmem:[%s292 + $0x30] sm:$0xff] %vm1461, %v1532
      %1565 = vst.msk [vmem:[%s292 + $0x38] sm:$0xff] %vm1461, %v1533
      %1566 = vst.msk [vmem:[%s292 + $0x40] sm:$0xff] %vm1461, %v1534
      %1567 = vst.msk [vmem:[%s292 + $0x48] sm:$0xff] %vm1461, %v1535
      %1568 = vst.msk [vmem:[%s292 + $0x50] sm:$0xff] %vm1461, %v1536
      %1569 = vst.msk [vmem:[%s292 + $0x58] sm:$0xff] %vm1461, %v1537
      %1570 = vst.msk [vmem:[%s292 + $0x60] sm:$0xff] %vm1461, %v1538
      %1571 = vst.msk [vmem:[%s292 + $0x68] sm:$0xff] %vm1461, %v1539
      %1572 = vst.msk [vmem:[%s292 + $0x70] sm:$0xff] %vm1461, %v1540
      %1573 = vst.msk [vmem:[%s292 + $0x78] sm:$0xff] %vm1461, %v1541
      %1574 = vst.msk [vmem:[%s292 + $0x80] sm:$0xff] %vm1461, %v1542
      %1575 = vst.msk [vmem:[%s292 + $0x88] sm:$0xff] %vm1461, %v1543
      %1576 = vst.msk [vmem:[%s292 + $0x90] sm:$0xff] %vm1461, %v1544
      %1577 = vst.msk [vmem:[%s292 + $0x98] sm:$0xff] %vm1461, %v1545
      %1578 = vst.msk [vmem:[%s292 + $0xa0] sm:$0xff] %vm1461, %v1546
      %1579 = vst.msk [vmem:[%s292 + $0xa8] sm:$0xff] %vm1461, %v1547
      %1580 = vst.msk [vmem:[%s292 + $0xb0] sm:$0xff] %vm1461, %v1548
      %1581 = vst.msk [vmem:[%s292 + $0xb8] sm:$0xff] %vm1461, %v1549
      %1582 = vst.msk [vmem:[%s292 + $0xc0] sm:$0xff] %vm1461, %v1550
      %1583 = vst.msk [vmem:[%s292 + $0xc8] sm:$0xff] %vm1461, %v1551
      %1584 = vst.msk [vmem:[%s292 + $0xd0] sm:$0xff] %vm1461, %v1552
      %1585 = vst.msk [vmem:[%s292 + $0xd8] sm:$0xff] %vm1461, %v1553
      %1586 = vst.msk [vmem:[%s292 + $0xe0] sm:$0xff] %vm1461, %v1554
      %1587 = vst.msk [vmem:[%s292 + $0xe8] sm:$0xff] %vm1461, %v1555
      %1588 = vst.msk [vmem:[%s292 + $0xf0] sm:$0xff] %vm1461, %v1556
      %1589 = vst.msk [vmem:[%s292 + $0xf8] sm:$0xff] %vm1461, %v1557
      %v1590 = vmax.f32 %v917, %v921
      %v1591 = vmax.f32 %v919, %v923
      %v1592 = vmax.f32 %v1590, %v925
      %v1593 = vmax.f32 %v1591, %v927
      %v1594 = vmax.f32 %v1592, %v929
      %v1595 = vmax.f32 %v1593, %v931
      %v1596 = vmax.f32 %v1594, %v933
      %v1597 = vmax.f32 %v1595, %v935
      %v1598 = vmax.f32 %v1596, %v937
      %v1599 = vmax.f32 %v1597, %v939
      %v1600 = vmax.f32 %v1598, %v941
      %v1601 = vmax.f32 %v1599, %v943
      %v1602 = vmax.f32 %v1600, %v945
      %v1603 = vmax.f32 %v1601, %v947
      %v1604 = vmax.f32 %v1602, %v949
      %v1605 = vmax.f32 %v1603, %v951
      %v1606 = vmax.f32 %v1604, %v953
      %v1607 = vmax.f32 %v1605, %v955
      %v1608 = vmax.f32 %v1606, %v957
      %v1609 = vmax.f32 %v1607, %v959
      %v1610 = vmax.f32 %v1608, %v961
      %v1611 = vmax.f32 %v1609, %v963
      %v1612 = vmax.f32 %v1610, %v965
      %v1613 = vmax.f32 %v1611, %v967
      %v1614 = vmax.f32 %v1612, %v969
      %v1615 = vmax.f32 %v1613, %v971
      %v1616 = vmax.f32 %v1614, %v973
      %v1617 = vmax.f32 %v1615, %v975
      %v1618 = vmax.f32 %v1616, %v977
      %v1619 = vmax.f32 %v1617, %v979
      %v1620 = vmax.f32 %v1618, %v1619
      %v1621 = vrot.slane %v1620, 4
      %v1622 = vmax.f32 %v1620, %v1621
      %v1623 = vrot.slane %v1622, 2
      %v1624 = vmax.f32 %v1622, %v1623
      %v1625 = vrot.slane %v1624, 1
      %v1626 = vmax.f32 %v1624, %v1625
      %v1627 = vmax.f32 %v918, %v922
      %v1628 = vmax.f32 %v920, %v924
      %v1629 = vmax.f32 %v1627, %v926
      %v1630 = vmax.f32 %v1628, %v928
      %v1631 = vmax.f32 %v1629, %v930
      %v1632 = vmax.f32 %v1630, %v932
      %v1633 = vmax.f32 %v1631, %v934
      %v1634 = vmax.f32 %v1632, %v936
      %v1635 = vmax.f32 %v1633, %v938
      %v1636 = vmax.f32 %v1634, %v940
      %v1637 = vmax.f32 %v1635, %v942
      %v1638 = vmax.f32 %v1636, %v944
      %v1639 = vmax.f32 %v1637, %v946
      %v1640 = vmax.f32 %v1638, %v948
      %v1641 = vmax.f32 %v1639, %v950
      %v1642 = vmax.f32 %v1640, %v952
      %v1643 = vmax.f32 %v1641, %v954
      %v1644 = vmax.f32 %v1642, %v956
      %v1645 = vmax.f32 %v1643, %v958
      %v1646 = vmax.f32 %v1644, %v960
      %v1647 = vmax.f32 %v1645, %v962
      %v1648 = vmax.f32 %v1646, %v964
      %v1649 = vmax.f32 %v1647, %v966
      %v1650 = vmax.f32 %v1648, %v968
      %v1651 = vmax.f32 %v1649, %v970
      %v1652 = vmax.f32 %v1650, %v972
      %v1653 = vmax.f32 %v1651, %v974
      %v1654 = vmax.f32 %v1652, %v976
      %v1655 = vmax.f32 %v1653, %v978
      %v1656 = vmax.f32 %v1654, %v980
      %v1657 = vmax.f32 %v1655, %v1656
      %v1658 = vrot.slane %v1657, 4
      %v1659 = vmax.f32 %v1657, %v1658
      %v1660 = vrot.slane %v1659, 2
      %v1661 = vmax.f32 %v1659, %v1660
      %v1662 = vrot.slane %v1661, 1
      %v1663 = vmax.f32 %v1661, %v1662
      %vm1664 = vcmp.ge.f32.partialorder %v917, %v919
      %v1665 = vsel %vm1664, %v917, %v919
      %v1666 = vsel %vm1664, %v679, %v680
      %vm1667 = vcmp.ge.f32.partialorder %v1665, %v921
      %v1668 = vsel %vm1667, %v1665, %v921
      %v1669 = vsel %vm1667, %v1666, %v681
      %vm1670 = vcmp.ge.f32.partialorder %v1668, %v923
      %v1671 = vsel %vm1670, %v1668, %v923
      %v1672 = vsel %vm1670, %v1669, %v682
      %vm1673 = vcmp.ge.f32.partialorder %v1671, %v925
      %v1674 = vsel %vm1673, %v1671, %v925
      %v1675 = vsel %vm1673, %v1672, %v683
      %vm1676 = vcmp.ge.f32.partialorder %v1674, %v927
      %v1677 = vsel %vm1676, %v1674, %v927
      %v1678 = vsel %vm1676, %v1675, %v684
      %vm1679 = vcmp.ge.f32.partialorder %v1677, %v929
      %v1680 = vsel %vm1679, %v1677, %v929
      %v1681 = vsel %vm1679, %v1678, %v685
      %vm1682 = vcmp.ge.f32.partialorder %v1680, %v931
      %v1683 = vsel %vm1682, %v1680, %v931
      %v1684 = vsel %vm1682, %v1681, %v686
      %vm1685 = vcmp.ge.f32.partialorder %v1683, %v933
      %v1686 = vsel %vm1685, %v1683, %v933
      %v1687 = vsel %vm1685, %v1684, %v687
      %vm1688 = vcmp.ge.f32.partialorder %v1686, %v935
      %v1689 = vsel %vm1688, %v1686, %v935
      %v1690 = vsel %vm1688, %v1687, %v688
      %vm1691 = vcmp.ge.f32.partialorder %v1689, %v937
      %v1692 = vsel %vm1691, %v1689, %v937
      %v1693 = vsel %vm1691, %v1690, %v689
      %vm1694 = vcmp.ge.f32.partialorder %v1692, %v939
      %v1695 = vsel %vm1694, %v1692, %v939
      %v1696 = vsel %vm1694, %v1693, %v690
      %vm1697 = vcmp.ge.f32.partialorder %v1695, %v941
      %v1698 = vsel %vm1697, %v1695, %v941
      %v1699 = vsel %vm1697, %v1696, %v691
      %vm1700 = vcmp.ge.f32.partialorder %v1698, %v943
      %v1701 = vsel %vm1700, %v1698, %v943
      %v1702 = vsel %vm1700, %v1699, %v692
      %vm1703 = vcmp.ge.f32.partialorder %v1701, %v945
      %v1704 = vsel %vm1703, %v1701, %v945
      %v1705 = vsel %vm1703, %v1702, %v693
      %vm1706 = vcmp.ge.f32.partialorder %v1704, %v947
      %v1707 = vsel %vm1706, %v1704, %v947
      %v1708 = vsel %vm1706, %v1705, %v694
      %vm1709 = vcmp.ge.f32.partialorder %v1707, %v949
      %v1710 = vsel %vm1709, %v1707, %v949
      %v1711 = vsel %vm1709, %v1708, %v695
      %vm1712 = vcmp.ge.f32.partialorder %v1710, %v951
      %v1713 = vsel %vm1712, %v1710, %v951
      %v1714 = vsel %vm1712, %v1711, %v696
      %vm1715 = vcmp.ge.f32.partialorder %v1713, %v953
      %v1716 = vsel %vm1715, %v1713, %v953
      %v1717 = vsel %vm1715, %v1714, %v697
      %vm1718 = vcmp.ge.f32.partialorder %v1716, %v955
      %v1719 = vsel %vm1718, %v1716, %v955
      %v1720 = vsel %vm1718, %v1717, %v698
      %vm1721 = vcmp.ge.f32.partialorder %v1719, %v957
      %v1722 = vsel %vm1721, %v1719, %v957
      %v1723 = vsel %vm1721, %v1720, %v699
      %vm1724 = vcmp.ge.f32.partialorder %v1722, %v959
      %v1725 = vsel %vm1724, %v1722, %v959
      %v1726 = vsel %vm1724, %v1723, %v700
      %vm1727 = vcmp.ge.f32.partialorder %v1725, %v961
      %v1728 = vsel %vm1727, %v1725, %v961
      %v1729 = vsel %vm1727, %v1726, %v701
      %vm1730 = vcmp.ge.f32.partialorder %v1728, %v963
      %v1731 = vsel %vm1730, %v1728, %v963
      %v1732 = vsel %vm1730, %v1729, %v702
      %vm1733 = vcmp.ge.f32.partialorder %v1731, %v965
      %v1734 = vsel %vm1733, %v1731, %v965
      %v1735 = vsel %vm1733, %v1732, %v703
      %vm1736 = vcmp.ge.f32.partialorder %v1734, %v967
      %v1737 = vsel %vm1736, %v1734, %v967
      %v1738 = vsel %vm1736, %v1735, %v704
      %vm1739 = vcmp.ge.f32.partialorder %v1737, %v969
      %v1740 = vsel %vm1739, %v1737, %v969
      %v1741 = vsel %vm1739, %v1738, %v705
      %vm1742 = vcmp.ge.f32.partialorder %v1740, %v971
      %v1743 = vsel %vm1742, %v1740, %v971
      %v1744 = vsel %vm1742, %v1741, %v706
      %vm1745 = vcmp.ge.f32.partialorder %v1743, %v973
      %v1746 = vsel %vm1745, %v1743, %v973
      %v1747 = vsel %vm1745, %v1744, %v707
      %vm1748 = vcmp.ge.f32.partialorder %v1746, %v975
      %v1749 = vsel %vm1748, %v1746, %v975
      %v1750 = vsel %vm1748, %v1747, %v708
      %vm1751 = vcmp.ge.f32.partialorder %v1749, %v977
      %v1752 = vsel %vm1751, %v1749, %v977
      %v1753 = vsel %vm1751, %v1750, %v709
      %vm1754 = vcmp.ge.f32.partialorder %v1752, %v979
      %v1755 = vsel %vm1754, %v1752, %v979
      %v1756 = vsel %vm1754, %v1753, %v710
      %v1757 = vrot.slane %v1755, 4
      %v1758 = vrot.slane %v1756, 4
      %vm1759 = vcmp.ge.f32.partialorder %v1755, %v1757
      %v1760 = vsel %vm1759, %v1755, %v1757
      %v1761 = vsel %vm1759, %v1756, %v1758
      %v1762 = vrot.slane %v1760, 6
      %v1763 = vrot.slane %v1761, 6
      %vm1764 = vcmp.ge.f32.partialorder %v1760, %v1762
      %v1765 = vsel %vm1764, %v1760, %v1762
      %v1766 = vsel %vm1764, %v1761, %v1763
      %v1767 = vrot.slane %v1765, 7
      %v1768 = vrot.slane %v1766, 7
      %vm1769 = vcmp.ge.f32.partialorder %v1765, %v1767
      %v1770 = vsel %vm1769, %v1766, %v1768
      %vm1771 = vcmp.ge.f32.partialorder %v918, %v920
      %v1772 = vsel %vm1771, %v918, %v920
      %v1773 = vsel %vm1771, %v679, %v680
      %vm1774 = vcmp.ge.f32.partialorder %v1772, %v922
      %v1775 = vsel %vm1774, %v1772, %v922
      %v1776 = vsel %vm1774, %v1773, %v681
      %vm1777 = vcmp.ge.f32.partialorder %v1775, %v924
      %v1778 = vsel %vm1777, %v1775, %v924
      %v1779 = vsel %vm1777, %v1776, %v682
      %vm1780 = vcmp.ge.f32.partialorder %v1778, %v926
      %v1781 = vsel %vm1780, %v1778, %v926
      %v1782 = vsel %vm1780, %v1779, %v683
      %vm1783 = vcmp.ge.f32.partialorder %v1781, %v928
      %v1784 = vsel %vm1783, %v1781, %v928
      %v1785 = vsel %vm1783, %v1782, %v684
      %vm1786 = vcmp.ge.f32.partialorder %v1784, %v930
      %v1787 = vsel %vm1786, %v1784, %v930
      %v1788 = vsel %vm1786, %v1785, %v685
      %vm1789 = vcmp.ge.f32.partialorder %v1787, %v932
      %v1790 = vsel %vm1789, %v1787, %v932
      %v1791 = vsel %vm1789, %v1788, %v686
      %vm1792 = vcmp.ge.f32.partialorder %v1790, %v934
      %v1793 = vsel %vm1792, %v1790, %v934
      %v1794 = vsel %vm1792, %v1791, %v687
      %vm1795 = vcmp.ge.f32.partialorder %v1793, %v936
      %v1796 = vsel %vm1795, %v1793, %v936
      %v1797 = vsel %vm1795, %v1794, %v688
      %vm1798 = vcmp.ge.f32.partialorder %v1796, %v938
      %v1799 = vsel %vm1798, %v1796, %v938
      %v1800 = vsel %vm1798, %v1797, %v689
      %vm1801 = vcmp.ge.f32.partialorder %v1799, %v940
      %v1802 = vsel %vm1801, %v1799, %v940
      %v1803 = vsel %vm1801, %v1800, %v690
      %vm1804 = vcmp.ge.f32.partialorder %v1802, %v942
      %v1805 = vsel %vm1804, %v1802, %v942
      %v1806 = vsel %vm1804, %v1803, %v691
      %vm1807 = vcmp.ge.f32.partialorder %v1805, %v944
      %v1808 = vsel %vm1807, %v1805, %v944
      %v1809 = vsel %vm1807, %v1806, %v692
      %vm1810 = vcmp.ge.f32.partialorder %v1808, %v946
      %v1811 = vsel %vm1810, %v1808, %v946
      %v1812 = vsel %vm1810, %v1809, %v693
      %vm1813 = vcmp.ge.f32.partialorder %v1811, %v948
      %v1814 = vsel %vm1813, %v1811, %v948
      %v1815 = vsel %vm1813, %v1812, %v694
      %vm1816 = vcmp.ge.f32.partialorder %v1814, %v950
      %v1817 = vsel %vm1816, %v1814, %v950
      %v1818 = vsel %vm1816, %v1815, %v695
      %vm1819 = vcmp.ge.f32.partialorder %v1817, %v952
      %v1820 = vsel %vm1819, %v1817, %v952
      %v1821 = vsel %vm1819, %v1818, %v696
      %vm1822 = vcmp.ge.f32.partialorder %v1820, %v954
      %v1823 = vsel %vm1822, %v1820, %v954
      %v1824 = vsel %vm1822, %v1821, %v697
      %vm1825 = vcmp.ge.f32.partialorder %v1823, %v956
      %v1826 = vsel %vm1825, %v1823, %v956
      %v1827 = vsel %vm1825, %v1824, %v698
      %vm1828 = vcmp.ge.f32.partialorder %v1826, %v958
      %v1829 = vsel %vm1828, %v1826, %v958
      %v1830 = vsel %vm1828, %v1827, %v699
      %vm1831 = vcmp.ge.f32.partialorder %v1829, %v960
      %v1832 = vsel %vm1831, %v1829, %v960
      %v1833 = vsel %vm1831, %v1830, %v700
      %vm1834 = vcmp.ge.f32.partialorder %v1832, %v962
      %v1835 = vsel %vm1834, %v1832, %v962
      %v1836 = vsel %vm1834, %v1833, %v701
      %vm1837 = vcmp.ge.f32.partialorder %v1835, %v964
      %v1838 = vsel %vm1837, %v1835, %v964
      %v1839 = vsel %vm1837, %v1836, %v702
      %vm1840 = vcmp.ge.f32.partialorder %v1838, %v966
      %v1841 = vsel %vm1840, %v1838, %v966
      %v1842 = vsel %vm1840, %v1839, %v703
      %vm1843 = vcmp.ge.f32.partialorder %v1841, %v968
      %v1844 = vsel %vm1843, %v1841, %v968
      %v1845 = vsel %vm1843, %v1842, %v704
      %vm1846 = vcmp.ge.f32.partialorder %v1844, %v970
      %v1847 = vsel %vm1846, %v1844, %v970
      %v1848 = vsel %vm1846, %v1845, %v705
      %vm1849 = vcmp.ge.f32.partialorder %v1847, %v972
      %v1850 = vsel %vm1849, %v1847, %v972
      %v1851 = vsel %vm1849, %v1848, %v706
      %vm1852 = vcmp.ge.f32.partialorder %v1850, %v974
      %v1853 = vsel %vm1852, %v1850, %v974
      %v1854 = vsel %vm1852, %v1851, %v707
      %vm1855 = vcmp.ge.f32.partialorder %v1853, %v976
      %v1856 = vsel %vm1855, %v1853, %v976
      %v1857 = vsel %vm1855, %v1854, %v708
      %vm1858 = vcmp.ge.f32.partialorder %v1856, %v978
      %v1859 = vsel %vm1858, %v1856, %v978
      %v1860 = vsel %vm1858, %v1857, %v709
      %vm1861 = vcmp.ge.f32.partialorder %v1859, %v980
      %v1862 = vsel %vm1861, %v1859, %v980
      %v1863 = vsel %vm1861, %v1860, %v710
      %v1864 = vrot.slane %v1862, 4
      %v1865 = vrot.slane %v1863, 4
      %vm1866 = vcmp.ge.f32.partialorder %v1862, %v1864
      %v1867 = vsel %vm1866, %v1862, %v1864
      %v1868 = vsel %vm1866, %v1863, %v1865
      %v1869 = vrot.slane %v1867, 6
      %v1870 = vrot.slane %v1868, 6
      %vm1871 = vcmp.ge.f32.partialorder %v1867, %v1869
      %v1872 = vsel %vm1871, %v1867, %v1869
      %v1873 = vsel %vm1871, %v1868, %v1870
      %v1874 = vrot.slane %v1872, 7
      %v1875 = vrot.slane %v1873, 7
      %vm1876 = vcmp.ge.f32.partialorder %v1872, %v1874
      %v1877 = vsel %vm1876, %v1873, %v1875
      %v1878 = vadd.s32 %v711, %v1770
      %v1879 = vadd.s32 %v711, %v1877
      %v1882 = vrot.slane %v1663, 7
      %vm1883 = vcmask 1040384
      %v1884 = vsel %vm1883, %v1626, %v1882
      %v1886 = vlaneseq
      %vm1887 = vcmp.ge.s32.totalorder %v1886, 0
      %vm1888 = vcmp.lt.s32.totalorder %v1886, 256
      %vm1889 = vmand %vm1887, %vm1888
      %1890 = vst.msk [vmem:[%s307] sm:$0x3] %vm1889, %v1884
      %v1891 = vrot.slane %v1879, 7
      %v1892 = vsel %vm1883, %v1878, %v1891
      %1893 = vst.msk [vmem:[%s316] sm:$0x3] %vm1889, %v1892
      %s1894 = smul.u32 32, %s21
      %p1895 = scmp.lt.s32.totalorder %s1894, 63
      %s1896 = scalar_select %p1895, %s1894, 63
      %s1897 = smul.addr %s1896, 8
      %s1898 = scalar_lea.vmem %s2, %s1897
      %s1899 = smul.u32 32, %s21
      %p1900 = scmp.lt.s32.totalorder %s1899, 63
      %s1901 = scalar_select %p1900, %s1899, 63
      %s1902 = smul.addr %s1901, 8
      %s1903 = scalar_lea.vmem %s3, %s1902
      %s1904 = smul.u32 2, %s22
      %p1905 = scmp.lt.s32.totalorder %s21, 1
      %s1906 = scalar_select %p1905, %s21, 1
      %p1907 = scmp.lt.s32.totalorder %s1904, 3
      %s1908 = scalar_select %p1907, %s1904, 3
      %s1909 = smul.addr %s1906, 4
      %s1910 = sadd.s32 %s1908, %s1909
      %s1911 = scalar_lea.vmem %s4, %s1910
      %s1912 = smul.u32 2, %s22
      %p1913 = scmp.lt.s32.totalorder %s21, 1
      %s1914 = scalar_select %p1913, %s21, 1
      %p1915 = scmp.lt.s32.totalorder %s1912, 3
      %s1916 = scalar_select %p1915, %s1912, 3
      %s1917 = smul.addr %s1914, 4
      %s1918 = sadd.s32 %s1916, %s1917
      %s1919 = scalar_lea.vmem %s5, %s1918
      // Predicated region
      $region33: #{_sift_device.5} parent=27 // pred_check
        %p1920 = pneg %p99
      $region34: #{_sift_device.5} parent=27 // pred_check_branch
        %1922 = sbr.rel (%p1920) target = $region36
      $region35: #{_sift_device.5} parent=27 // pred_region
        %s1923 = smul.u32 32, %s21
      $region36: #{_sift_device.5} parent=27 // pred_fallthru
        _
      // Predicated region
      $region37: #{_sift_device.5} parent=27 // pred_check
        %p1924 = pneg %p125
      $region38: #{_sift_device.5} parent=27 // pred_check_branch
        %1926 = sbr.rel (%p1924) target = $region40
      $region39: #{_sift_device.5} parent=27 // pred_region
        %s1927 = smul.u32 32, %s21
      $region40: #{_sift_device.5} parent=27 // pred_fallthru
        _
      // Predicated region
      $region41: #{_sift_device.5} parent=27 // pred_check
        %p1928 = pneg %p153
      $region42: #{_sift_device.5} parent=27 // pred_check_branch
        %1930 = sbr.rel (%p1928) target = $region44
      $region43: #{_sift_device.5} parent=27 // pred_region
        %s1931 = smul.u32 2, %s22
      $region44: #{_sift_device.5} parent=27 // pred_fallthru
        _
      // Predicated region
      $region45: #{_sift_device.5} parent=27 // pred_check
        %p1932 = pneg %p181
      $region46: #{_sift_device.5} parent=27 // pred_check_branch
        %1934 = sbr.rel (%p1932) target = $region48
      $region47: #{_sift_device.5} parent=27 // pred_region
        %s1935 = smul.u32 2, %s22
      $region48: #{_sift_device.5} parent=27 // pred_fallthru
        _
    $region28: #{_sift_device.5} parent=5 // pred_fallthru
      _
    %p1936 = scmp.le.s32.totalorder 2, %s12
    // Predicated region
    $region49: #{_sift_device.5} parent=5 // pred_check
      %p1937 = pneg %p1936
    $region50: #{_sift_device.5} parent=5 // pred_check_branch
      %1939 = sbr.rel (%p1937) target = $region52
    $region51: #{_sift_device.5} parent=5 // pred_region
      %s1940 = ssub.s32 %s12, 2
      // Predicated region
      $region53: #{_sift_device.5} parent=51 // pred_check
        %p1941 = pneg %p105
      $region54: #{_sift_device.5} parent=51 // pred_check_branch
        %1943 = sbr.rel (%p1941) target = $region56
      $region55: #{_sift_device.5} parent=51 // pred_region
        %s1944 = smul.u32 32, %s23
        %p1945 = scmp.lt.s32.totalorder %s1944, 63
        %s1946 = scalar_select %p1945, %s1944, 63
        %s1947 = smul.addr %s1946, 8
        %s1948 = scalar_lea.vmem %s2, %s1947
      $region56: #{_sift_device.5} parent=51 // pred_fallthru
        _
      // Predicated region
      $region57: #{_sift_device.5} parent=51 // pred_check
        %p1949 = pneg %p131
      $region58: #{_sift_device.5} parent=51 // pred_check_branch
        %1951 = sbr.rel (%p1949) target = $region60
      $region59: #{_sift_device.5} parent=51 // pred_region
        %s1952 = smul.u32 32, %s23
        %p1953 = scmp.lt.s32.totalorder %s1952, 63
        %s1954 = scalar_select %p1953, %s1952, 63
        %s1955 = smul.addr %s1954, 8
        %s1956 = scalar_lea.vmem %s3, %s1955
      $region60: #{_sift_device.5} parent=51 // pred_fallthru
        _
      // Predicated region
      $region61: #{_sift_device.5} parent=51 // pred_check
        %p1957 = pneg %p159
      $region62: #{_sift_device.5} parent=51 // pred_check_branch
        %1959 = sbr.rel (%p1957) target = $region64
      $region63: #{_sift_device.5} parent=51 // pred_region
        %s1960 = smul.u32 2, %s24
        %p1961 = scmp.lt.s32.totalorder %s23, 1
        %s1962 = scalar_select %p1961, %s23, 1
        %p1963 = scmp.lt.s32.totalorder %s1960, 3
        %s1964 = scalar_select %p1963, %s1960, 3
        %s1965 = smul.addr %s1962, 4
        %s1966 = sadd.s32 %s1964, %s1965
        %s1967 = scalar_lea.vmem %s4, %s1966
      $region64: #{_sift_device.5} parent=51 // pred_fallthru
        _
      // Predicated region
      $region65: #{_sift_device.5} parent=51 // pred_check
        %p1968 = pneg %p187
      $region66: #{_sift_device.5} parent=51 // pred_check_branch
        %1970 = sbr.rel (%p1968) target = $region68
      $region67: #{_sift_device.5} parent=51 // pred_region
        %s1971 = smul.u32 2, %s24
        %p1972 = scmp.lt.s32.totalorder %s23, 1
        %s1973 = scalar_select %p1972, %s23, 1
        %p1974 = scmp.lt.s32.totalorder %s1971, 3
        %s1975 = scalar_select %p1974, %s1971, 3
        %s1976 = smul.addr %s1973, 4
        %s1977 = sadd.s32 %s1975, %s1976
        %s1978 = scalar_lea.vmem %s5, %s1977
      $region68: #{_sift_device.5} parent=51 // pred_fallthru
        _
    $region52: #{_sift_device.5} parent=5 // pred_fallthru
      _
  $region6: #{_sift_device.5} parent=0 // loop_footer
    %s16 = sadd.s32 1, %s12
  $region7: #{_sift_device.5} parent=0 // loop_footer_branch
    %11 = sbr.rel target = $region3
  $region8: #{_sift_device.5} parent=0 // loop_exit
    _

</llo_original>
